<compile_context>
chip_gen: v6e
topology: v6e:2x2x1
jax: 0.10.0
libtpu: 0.0.40
codegen_flags: <defaults>
</compile_context>

<pallas_src>
import functools
import math

import jax
import jax.numpy as jnp
from jax.experimental import pallas as pl
from jax.experimental.pallas import tpu as pltpu

# Make the f32 reference / f32 kernel path numerically comparable (avoid
# default bf16-pass matmul noise on TPU).
jax.config.update("jax_default_matmul_precision", "highest")


def _round_up(x, m):
    return ((x + m - 1) // m) * m


def _cdiv(a, b):
    return (a + b - 1) // b


def _num_tensorcores():
    """v7x has 2 TensorCores per chip; v5e/v6e have 1."""
    try:
        kind = jax.devices()[0].device_kind.lower()
        if "v7" in kind or "tpu7" in kind:
            return 2
    except Exception:
        pass
    return 1


# ----------------------------------------------------------------------------
# Kernel: one batch tile per grid step, all (padded) weights VMEM-resident.
# ----------------------------------------------------------------------------
def _transweigh_kernel(cat_ref, *rest, normalize_embeddings, add_single_words,
                       fuse_transformations):
    refs = list(rest)
    out_ref = refs.pop()
    bo_ref = refs.pop()
    wo_ref = refs.pop()
    bh_ref = refs.pop()
    wh_12_ref = refs.pop() if add_single_words else None
    wh_c_ref = refs.pop()
    b_eff_ref = refs.pop()
    if fuse_transformations:
        (w_eff_ref,) = refs
    else:
        tt_ref, ct_ref = refs

    cat = cat_ref[...]                    # [BM, K2p] = [w1 | w2], matmul dtype
    mm = cat.dtype                        # bf16 (fast path) or f32 (exact path)

    if fuse_transformations:
        # composed = cat @ (T.C) + (tb.C + cb)    (exact while dropout == 0)
        composed = jnp.dot(cat, w_eff_ref[...],
                           preferred_element_type=jnp.float32)
    else:
        # trans = cat @ T_flat   (single K=2D matmul)  -> [BM, t*Dp], f32 accum
        trans = jnp.dot(cat, tt_ref[...], preferred_element_type=jnp.float32)
        # TODO(synk): dropout on the transformed reps omitted (rate 0 -> identity)
        composed = jnp.dot(trans.astype(mm), ct_ref[...],
                           preferred_element_type=jnp.float32)
    composed = composed + b_eff_ref[...]                       # [BM, Dp]

    if normalize_embeddings:
        # F.normalize(p=2, dim=1): x / max(||x||, 1e-12) == x * rsqrt(max(ss, 1e-24))
        ss = jnp.sum(composed * composed, axis=1, keepdims=True)
        composed = composed * jax.lax.rsqrt(jnp.maximum(ss, 1e-24))

    # hidden = ReLU(Linear([w1, w2, composed])) -- concat replaced by split weights
    hidden = jnp.dot(composed.astype(mm), wh_c_ref[...],
                     preferred_element_type=jnp.float32)
    if add_single_words:
        hidden = hidden + jnp.dot(cat, wh_12_ref[...],
                                  preferred_element_type=jnp.float32)
    hidden = jnp.maximum(hidden + bh_ref[...], 0.0)
    # TODO(synk): dropout after the hidden ReLU omitted (rate 0 -> identity)

    out_ref[...] = (jnp.dot(hidden.astype(mm), wo_ref[...],
                            preferred_element_type=jnp.float32) + bo_ref[...])


# ----------------------------------------------------------------------------
# Wrapper: host-side padding / stacking / bias folding (pure glue) + pallas_call.
# ----------------------------------------------------------------------------
def transweigh_two_word_classifier(w1, w2, params, *, normalize_embeddings,
                                   add_single_words=False,
                                   fuse_transformations=True,
                                   matmul_dtype=jnp.bfloat16,
                                   block_batch=512,
                                   weight_buffer_count=None):
    B, D = w1.shape
    T = params["transformation_tensor"]        # [t, 2D, D]
    tb = params["transformation_bias"]         # [t, D]
    C = params["combining_tensor"]             # [t, D, D]
    cb = params["combining_bias"]              # [D]
    Wh = params["hidden_w"]                    # [H, in]  (PyTorch layout: out, in)
    bh = params["hidden_b"]                    # [H]
    Wo = params["output_w"]                    # [L, H]
    bo = params["output_b"]                    # [L]

    t = T.shape[0]
    H = Wh.shape[0]
    L = Wo.shape[0]

    f32 = jnp.float32
    mm = matmul_dtype
    mm_itemsize = jnp.dtype(mm).itemsize

    # Lane-dense padded dims (zero padding keeps the math exact).
    Dp = _round_up(D, 128)
    K2p = _round_up(2 * D, 128)
    HP = _round_up(H, 128)
    LP = _round_up(L, 128)
    TDp = t * Dp

    # --- Batch tiling: no over-rounding; >=2 blocks on v7x when batch allows.
    sublane = 16 if jnp.dtype(mm) == jnp.dtype(jnp.bfloat16) else 8
    n_blocks = max(_cdiv(B, block_batch),
                   min(_num_tensorcores(), _cdiv(B, sublane)))
    BM = _round_up(_cdiv(B, n_blocks), sublane)
    Bp = BM * n_blocks

    def pad2(x, rows, cols):
        return jnp.pad(x, ((0, rows - x.shape[0]), (0, cols - x.shape[1])))

    # Concatenated input (host-side glue -- NOT an in-kernel lane concat).
    cat = jnp.concatenate([w1, w2], axis=1)                       # [B, 2D]
    cat_p = pad2(cat, Bp, K2p).astype(mm)

    # Fold the transformation bias into the combining bias (exact algebra):
    #   composed = (cat@T + tb)@C + cb = cat@T@C + (tb@C + cb)
    b_eff = jnp.einsum("tj,tjk->k", tb, C) + cb                   # [D]
    b_eff_p = jnp.pad(b_eff, (0, Dp - D)).reshape(1, Dp).astype(f32)

    if fuse_transformations:
        # TODO(synk): collapse only valid while dropout between T and C is 0.
        w_eff = jnp.einsum("tij,tjk->ik", T, C)                   # [2D, D]
        tw_weights = (pad2(w_eff, K2p, Dp).astype(mm),)
    else:
        # Stacked / flattened transformation tensor: trans = cat @ tt (K = 2D).
        tt = jnp.pad(T, ((0, 0), (0, 0), (0, Dp - D)))            # [t, 2D, Dp]
        tt = jnp.transpose(tt, (1, 0, 2)).reshape(2 * D, TDp)
        tt_p = pad2(tt, K2p, TDp).astype(mm)
        ct_p = jnp.pad(C, ((0, 0), (0, Dp - D), (0, Dp - D))
                       ).reshape(TDp, Dp).astype(mm)
        tw_weights = (tt_p, ct_p)

    wh_t = Wh.T                                                   # [in, H]
    if add_single_words:
        wh_12 = pad2(wh_t[:2 * D], K2p, HP).astype(mm)            # [w1|w2] rows
        wh_c = pad2(wh_t[2 * D:], Dp, HP).astype(mm)              # composed rows
        hidden_weights = (wh_c, wh_12)
    else:
        wh_c = pad2(wh_t, Dp, HP).astype(mm)
        hidden_weights = (wh_c,)
    bh_p = jnp.pad(bh, (0, HP - H)).reshape(1, HP).astype(f32)
    wo_p = pad2(Wo.T, HP, LP).astype(mm)
    bo_p = jnp.pad(bo, (0, LP - L)).reshape(1, LP).astype(f32)

    weights = tw_weights + (b_eff_p,) + hidden_weights + (bh_p, wo_p, bo_p)
    inputs = (cat_p,) + weights

    # Weights stay VMEM-resident across batch tiles (constant index maps).
    # For large D/t (e.g. fuse_transformations=False on v7x), pass
    # weight_buffer_count=1 to single-buffer them (pl.Buffered) and halve
    # their VMEM footprint.
    wspec_kwargs = {}
    if weight_buffer_count is not None:
        wspec_kwargs["pipeline_mode"] = pl.Buffered(weight_buffer_count)

    def wspec(arr):
        return pl.BlockSpec(arr.shape, lambda i: (0, 0), **wspec_kwargs)

    in_specs = ([pl.BlockSpec((BM, K2p), lambda i: (i, 0))]
                + [wspec(a) for a in weights])
    out_specs = pl.BlockSpec((BM, LP), lambda i: (i, 0))

    kernel = functools.partial(_transweigh_kernel,
                               normalize_embeddings=normalize_embeddings,
                               add_single_words=add_single_words,
                               fuse_transformations=fuse_transformations)

    # Rough VMEM footprint -> raise the scoped-VMEM cap only when needed
    # (v5e default 16 MiB, v6e/v7x 32 MiB; keep below v7x's 64 MiB physical).
    weight_bytes = sum(int(a.size) * a.dtype.itemsize for a in weights)
    act_bytes = 2 * BM * (K2p * mm_itemsize + LP * 4)     # double-buffered tiles
    interm_bytes = BM * 4 * (Dp + HP
                             + (0 if fuse_transformations else TDp))
    wbuf = 1 if weight_buffer_count == 1 else 2
    vmem_est = wbuf * weight_bytes + act_bytes + interm_bytes
    cp_kwargs = dict(dimension_semantics=("parallel",))
    if vmem_est > 24 * (1 << 20):
        cp_kwargs["vmem_limit_bytes"] = min(int(vmem_est * 1.25) + (4 << 20),
                                            60 << 20)

    # Advisory cost estimate (this call is launch/latency-bound at small sizes).
    if fuse_transformations:
        mm_flops = 2 * Bp * (K2p * Dp + Dp * HP + HP * LP)
    else:
        mm_flops = 2 * Bp * (K2p * TDp + TDp * Dp + Dp * HP + HP * LP)
    if add_single_words:
        mm_flops += 2 * Bp * K2p * HP
    bytes_accessed = int(Bp * K2p * mm_itemsize + weight_bytes + Bp * LP * 4)
    cost = pl.CostEstimate(flops=int(mm_flops),
                           transcendentals=int(Bp) if normalize_embeddings else 0,
                           bytes_accessed=bytes_accessed)

    out = pl.pallas_call(
        kernel,
        out_shape=jax.ShapeDtypeStruct((Bp, LP), jnp.float32),
        grid=(n_blocks,),
        in_specs=in_specs,
        out_specs=out_specs,
        compiler_params=pltpu.CompilerParams(**cp_kwargs),
        cost_estimate=cost,
    )(*inputs)

    return out[:B, :L]


# ----------------------------------------------------------------------------
# Pure-JAX reference (mirrors the PyTorch semantics) for verification.
# ----------------------------------------------------------------------------
def reference_forward(w1, w2, params, *, normalize_embeddings, add_single_words):
    cat = jnp.concatenate([w1, w2], axis=1)
    trans = jnp.einsum("bi,tij->btj", cat, params["transformation_tensor"])
    trans = trans + params["transformation_bias"]
    composed = jnp.einsum("btj,tjk->bk", trans, params["combining_tensor"])
    composed = composed + params["combining_bias"]
    if normalize_embeddings:
        n = jnp.sqrt(jnp.sum(composed ** 2, axis=1, keepdims=True))
        composed = composed / jnp.maximum(n, 1e-12)
    if add_single_words:
        composed = jnp.concatenate([w1, w2, composed], axis=1)
    hidden = jax.nn.relu(composed @ params["hidden_w"].T + params["hidden_b"])
    return hidden @ params["output_w"].T + params["output_b"]


# ----------------------------------------------------------------------------
# Deterministic parameter construction (shapes from the module __init__).
# ----------------------------------------------------------------------------
def init_params(key, input_dim, hidden_dim, label_nr, transformations,
                add_single_words=False):
    ks = jax.random.split(key, 8)
    D, t = input_dim, transformations

    def xavier_normal(k, shape):
        rf = 1
        for s in shape[2:]:
            rf *= s
        fan_in, fan_out = shape[1] * rf, shape[0] * rf
        std = math.sqrt(2.0 / (fan_in + fan_out))
        return std * jax.random.normal(k, shape, dtype=jnp.float32)

    def linear_init(kw, kb, out_f, in_f):
        bound = 1.0 / math.sqrt(in_f)
        w = jax.random.uniform(kw, (out_f, in_f), jnp.float32, -bound, bound)
        b = jax.random.uniform(kb, (out_f,), jnp.float32, -bound, bound)
        return w, b

    hidden_in = 3 * D if add_single_words else D
    hw, hb = linear_init(ks[4], ks[5], hidden_dim, hidden_in)
    ow, ob = linear_init(ks[6], ks[7], label_nr, hidden_dim)
    return {
        "transformation_tensor": xavier_normal(ks[0], (t, 2 * D, D)),
        "transformation_bias": jax.random.uniform(ks[1], (t, D), jnp.float32),
        "combining_tensor": xavier_normal(ks[2], (t, D, D)),
        "combining_bias": jax.random.uniform(ks[3], (D,), jnp.float32),
        "hidden_w": hw, "hidden_b": hb,
        "output_w": ow, "output_b": ob,
    }


if __name__ == "__main__":
    B, D, t, H, L = 8, 32, 4, 32, 5
    normalize_embeddings = True
    dropout_rate = 0.0  # dropout is identity at p=0 (see TODOs in kernel)

    key = jax.random.PRNGKey(0)
    k1, k2, kp = jax.random.split(key, 3)
    w1 = jax.random.normal(k1, (B, D), dtype=jnp.float32)
    w2 = jax.random.normal(k2, (B, D), dtype=jnp.float32)

    # --- default configuration (add_single_words=False) ---
    params = init_params(kp, D, H, L, t, add_single_words=False)
    ref = reference_forward(w1, w2, params,
                            normalize_embeddings=normalize_embeddings,
                            add_single_words=False)

    # Strict check: fused (T.C folded) f32 MXU path.
    out_f32 = transweigh_two_word_classifier(
        w1, w2, params, normalize_embeddings=normalize_embeddings,
        add_single_words=False, fuse_transformations=True,
        matmul_dtype=jnp.float32)
    out_f32 = jax.block_until_ready(out_f32)
    assert out_f32.shape == (B, L)
    assert jnp.allclose(out_f32, ref, atol=1e-4, rtol=1e-4), "fused f32 mismatch"

    # Strict check: unfused two-matmul path (kept for non-zero-dropout use).
    out_unfused = transweigh_two_word_classifier(
        w1, w2, params, normalize_embeddings=normalize_embeddings,
        add_single_words=False, fuse_transformations=False,
        matmul_dtype=jnp.float32)
    out_unfused = jax.block_until_ready(out_unfused)
    assert out_unfused.shape == (B, L)
    assert jnp.allclose(out_unfused, ref, atol=1e-4, rtol=1e-4), \
        "unfused f32 mismatch"

    # Fast path: bf16 MXU inputs with f32 accumulation (looser tolerance).
    out_bf16 = transweigh_two_word_classifier(
        w1, w2, params, normalize_embeddings=normalize_embeddings,
        add_single_words=False, fuse_transformations=True,
        matmul_dtype=jnp.bfloat16)
    out_bf16 = jax.block_until_ready(out_bf16)
    assert out_bf16.shape == (B, L)
    assert jnp.allclose(out_bf16, ref, atol=5e-2, rtol=5e-2), "bf16 path mismatch"

    # --- add_single_words=True branch (stacked hidden weights, no concat) ---
    params_asw = init_params(kp, D, H, L, t, add_single_words=True)
    ref_asw = reference_forward(w1, w2, params_asw,
                                normalize_embeddings=normalize_embeddings,
                                add_single_words=True)
    out_asw = transweigh_two_word_classifier(
        w1, w2, params_asw, normalize_embeddings=normalize_embeddings,
        add_single_words=True, fuse_transformations=True,
        matmul_dtype=jnp.float32)
    out_asw = jax.block_until_ready(out_asw)
    assert out_asw.shape == (B, L)
    assert jnp.allclose(out_asw, ref_asw, atol=1e-4, rtol=1e-4), \
        "add_single_words mismatch"

    print("KERNEL_OK")
</pallas_src>

<mosaic_0001>
module attributes {stable_mosaic.version = 11 : i64} {
  func.func @_transweigh_kernel(%arg0: i32, %arg1: memref<8x128xf32, #tpu.memory_space<vmem>>, %arg2: memref<128x128xf32, #tpu.memory_space<vmem>>, %arg3: memref<1x128xf32, #tpu.memory_space<vmem>>, %arg4: memref<128x128xf32, #tpu.memory_space<vmem>>, %arg5: memref<1x128xf32, #tpu.memory_space<vmem>>, %arg6: memref<128x128xf32, #tpu.memory_space<vmem>>, %arg7: memref<1x128xf32, #tpu.memory_space<vmem>>, %arg8: memref<8x128xf32, #tpu.memory_space<vmem>>) attributes {dimension_semantics = [#tpu.dimension_semantics<parallel>], iteration_bounds = array<i64: 1>, scalar_prefetch = 0 : i64, scratch_operands = 0 : i64, tpu.core_type = #tpu.core_type<tc>, window_params = [{transform_indices = @transform_0, window_bounds = array<i64: 8, 128>}, {pipeline_mode = #tpu.pipeline_mode<synchronous>, transform_indices = @transform_1, window_bounds = array<i64: 128, 128>}, {pipeline_mode = #tpu.pipeline_mode<synchronous>, transform_indices = @transform_2, window_bounds = array<i64: 1, 128>}, {pipeline_mode = #tpu.pipeline_mode<synchronous>, transform_indices = @transform_3, window_bounds = array<i64: 128, 128>}, {pipeline_mode = #tpu.pipeline_mode<synchronous>, transform_indices = @transform_4, window_bounds = array<i64: 1, 128>}, {pipeline_mode = #tpu.pipeline_mode<synchronous>, transform_indices = @transform_5, window_bounds = array<i64: 128, 128>}, {pipeline_mode = #tpu.pipeline_mode<synchronous>, transform_indices = @transform_6, window_bounds = array<i64: 1, 128>}, {transform_indices = @transform_7, window_bounds = array<i64: 8, 128>}]} {
    %c0 = arith.constant 0 : index
    %c0_0 = arith.constant 0 : index
    %0 = vector.load %arg1[%c0, %c0_0] : memref<8x128xf32, #tpu.memory_space<vmem>>, vector<8x128xf32>
    %c0_1 = arith.constant 0 : index
    %c0_2 = arith.constant 0 : index
    %1 = vector.load %arg2[%c0_1, %c0_2] : memref<128x128xf32, #tpu.memory_space<vmem>>, vector<128x128xf32>
    %cst = arith.constant dense<0.000000e+00> : vector<8x128xf32>
    %2 = tpu.matmul %0, %1, %cst {dimension_numbers = #tpu.dot_dimension_numbers<[1], [0], [0], [1], [0, 0, 1, 1], [], []>, precision = #tpu.contract_precision<fp32>} : vector<8x128xf32>, vector<128x128xf32>, vector<8x128xf32> -> vector<8x128xf32>
    %c0_3 = arith.constant 0 : index
    %c0_4 = arith.constant 0 : index
    %3 = vector.load %arg3[%c0_3, %c0_4] : memref<1x128xf32, #tpu.memory_space<vmem>>, vector<1x128xf32>
    %4 = vector.broadcast %3 : vector<1x128xf32> to vector<8x128xf32>
    %5 = arith.addf %2, %4 : vector<8x128xf32>
    %6 = arith.mulf %5, %5 : vector<8x128xf32>
    %cst_5 = arith.constant dense<0.000000e+00> : vector<8xf32>
    %7 = vector.multi_reduction <add>, %6, %cst_5 [1] : vector<8x128xf32> to vector<8xf32>
    %8 = vector.shape_cast %7 : vector<8xf32> to vector<8x1xf32>
    %cst_6 = arith.constant 1.000000e-24 : f32
    %9 = vector.broadcast %cst_6 : f32 to vector<8x1xf32>
    %10 = arith.maximumf %8, %9 : vector<8x1xf32>
    %11 = math.rsqrt %10 : vector<8x1xf32>
    %12 = vector.broadcast %11 : vector<8x1xf32> to vector<8x128xf32>
    %13 = arith.mulf %5, %12 : vector<8x128xf32>
    %c0_7 = arith.constant 0 : index
    %c0_8 = arith.constant 0 : index
    %14 = vector.load %arg4[%c0_7, %c0_8] : memref<128x128xf32, #tpu.memory_space<vmem>>, vector<128x128xf32>
    %cst_9 = arith.constant dense<0.000000e+00> : vector<8x128xf32>
    %15 = tpu.matmul %13, %14, %cst_9 {dimension_numbers = #tpu.dot_dimension_numbers<[1], [0], [0], [1], [0, 0, 1, 1], [], []>, precision = #tpu.contract_precision<fp32>} : vector<8x128xf32>, vector<128x128xf32>, vector<8x128xf32> -> vector<8x128xf32>
    %c0_10 = arith.constant 0 : index
    %c0_11 = arith.constant 0 : index
    %16 = vector.load %arg5[%c0_10, %c0_11] : memref<1x128xf32, #tpu.memory_space<vmem>>, vector<1x128xf32>
    %17 = vector.broadcast %16 : vector<1x128xf32> to vector<8x128xf32>
    %18 = arith.addf %15, %17 : vector<8x128xf32>
    %cst_12 = arith.constant 0.000000e+00 : f32
    %19 = vector.broadcast %cst_12 : f32 to vector<8x128xf32>
    %20 = arith.maximumf %18, %19 : vector<8x128xf32>
    %c0_13 = arith.constant 0 : index
    %c0_14 = arith.constant 0 : index
    %21 = vector.load %arg6[%c0_13, %c0_14] : memref<128x128xf32, #tpu.memory_space<vmem>>, vector<128x128xf32>
    %cst_15 = arith.constant dense<0.000000e+00> : vector<8x128xf32>
    %22 = tpu.matmul %20, %21, %cst_15 {dimension_numbers = #tpu.dot_dimension_numbers<[1], [0], [0], [1], [0, 0, 1, 1], [], []>, precision = #tpu.contract_precision<fp32>} : vector<8x128xf32>, vector<128x128xf32>, vector<8x128xf32> -> vector<8x128xf32>
    %c0_16 = arith.constant 0 : index
    %c0_17 = arith.constant 0 : index
    %23 = vector.load %arg7[%c0_16, %c0_17] : memref<1x128xf32, #tpu.memory_space<vmem>>, vector<1x128xf32>
    %24 = vector.broadcast %23 : vector<1x128xf32> to vector<8x128xf32>
    %25 = arith.addf %22, %24 : vector<8x128xf32>
    %c0_18 = arith.constant 0 : index
    %c0_19 = arith.constant 0 : index
    %26 = vector.load %arg8[%c0_18, %c0_19] : memref<8x128xf32, #tpu.memory_space<vmem>>, vector<8x128xf32>
    tpu.vector_store %arg8[%c0_18, %c0_19], %25 {strides = array<i32>} : memref<8x128xf32, #tpu.memory_space<vmem>>, vector<8x128xf32>,
    return
  }
  func.func @transform_0(%arg0: i32) -> (i32, i32) {
    %c0_i32 = arith.constant 0 : i32
    %c0_i32_0 = arith.constant 0 : i32
    return %arg0, %c0_i32 : i32, i32
  }
  func.func @transform_1(%arg0: i32) -> (i32, i32) {
    %c0_i32 = arith.constant 0 : i32
    %c0_i32_0 = arith.constant 0 : i32
    %c0_i32_1 = arith.constant 0 : i32
    return %c0_i32, %c0_i32_0 : i32, i32
  }
  func.func @transform_2(%arg0: i32) -> (i32, i32) {
    %c0_i32 = arith.constant 0 : i32
    %c0_i32_0 = arith.constant 0 : i32
    %c0_i32_1 = arith.constant 0 : i32
    return %c0_i32, %c0_i32_0 : i32, i32
  }
  func.func @transform_3(%arg0: i32) -> (i32, i32) {
    %c0_i32 = arith.constant 0 : i32
    %c0_i32_0 = arith.constant 0 : i32
    %c0_i32_1 = arith.constant 0 : i32
    return %c0_i32, %c0_i32_0 : i32, i32
  }
  func.func @transform_4(%arg0: i32) -> (i32, i32) {
    %c0_i32 = arith.constant 0 : i32
    %c0_i32_0 = arith.constant 0 : i32
    %c0_i32_1 = arith.constant 0 : i32
    return %c0_i32, %c0_i32_0 : i32, i32
  }
  func.func @transform_5(%arg0: i32) -> (i32, i32) {
    %c0_i32 = arith.constant 0 : i32
    %c0_i32_0 = arith.constant 0 : i32
    %c0_i32_1 = arith.constant 0 : i32
    return %c0_i32, %c0_i32_0 : i32, i32
  }
  func.func @transform_6(%arg0: i32) -> (i32, i32) {
    %c0_i32 = arith.constant 0 : i32
    %c0_i32_0 = arith.constant 0 : i32
    %c0_i32_1 = arith.constant 0 : i32
    return %c0_i32, %c0_i32_0 : i32, i32
  }
  func.func @transform_7(%arg0: i32) -> (i32, i32) {
    %c0_i32 = arith.constant 0 : i32
    %c0_i32_0 = arith.constant 0 : i32
    return %arg0, %c0_i32 : i32, i32
  }
}

</mosaic_0001>

<llo_original>
// kernel: tpu_custom_call.1
$region0: #{tpu_custom_call.1}
  #allocation0 [shape = 'u32[]', space=smem, size = 0x4, offset = 0x4, fixed_abs, tag = 'smem constant byte address 0x4 - core index']
  #allocation1 [shape = 'u32[144,128]{1,0:T(1,128)}', space=vmem, size = 0x12000, scoped, tag = 'internal scratch']
  %s0 = inlined_call_operand.hbm [shape: f32[8,128], index: 0, kind: input, shape index: {}]
  %s1 = inlined_call_operand.hbm [shape: f32[128,128], index: 1, kind: input, shape index: {}]
  %s2 = inlined_call_operand.vmem [shape: f32[1,128], index: 2, kind: input, shape index: {}]
  %s3 = inlined_call_operand.hbm [shape: f32[128,128], index: 3, kind: input, shape index: {}]
  %s4 = inlined_call_operand.vmem [shape: f32[1,128], index: 4, kind: input, shape index: {}]
  %s5 = inlined_call_operand.hbm [shape: f32[128,128], index: 5, kind: input, shape index: {}]
  %s6 = inlined_call_operand.vmem [shape: f32[1,128], index: 6, kind: input, shape index: {}]
  %s7 = inlined_call_operand.hbm [shape: f32[8,128], index: 7, kind: output, shape index: {}]
  %s8 = sld [smem:[#allocation0]]
  $region54: #{tpu_custom_call.1} parent=0
    _
  %s10 = ssub.s32 1, %s8
  %s11 = scalar_select 0, %s10, %s8
  $region1: #{tpu_custom_call.1} parent=0
    #allocation2 [shape = 'u8[4096]{0}', space=vmem, size = 0x1000, scoped, tag = 'input window, operand 0, single buffered']
    #allocation3 [shape = 's32[1]{0}', space=sflag, size = 0x4, scoped, tag = 'scoped memory for tpu_custom_call.1']
    #allocation4 [shape = 's32[1]{0}', space=sflag, size = 0x4, scoped, tag = 'scoped memory for tpu_custom_call.1']
    #allocation5 [shape = 'u8[65536]{0}', space=vmem, size = 0x10000, scoped, tag = 'input window, operand 1, single buffered']
    #allocation6 [shape = 's32[1]{0}', space=sflag, size = 0x4, scoped, tag = 'scoped memory for tpu_custom_call.1']
    #allocation7 [shape = 'u8[65536]{0}', space=vmem, size = 0x10000, scoped, tag = 'input window, operand 3, single buffered']
    #allocation8 [shape = 'u8[65536]{0}', space=vmem, size = 0x10000, scoped, tag = 'input window, operand 5, single buffered']
    #allocation9 [shape = 's32[1]{0}', space=sflag, size = 0x4, scoped, tag = 'scoped memory for tpu_custom_call.1']
    #allocation10 [shape = 'u8[4096]{0}', space=vmem, size = 0x1000, scoped, tag = 'output window, operand 0, single buffered']
    %12 = vsyncpa [#allocation3], 0
    %13 = vsyncpa [#allocation6], 0
    %14 = vsyncpa [#allocation9], 0
    %15 = vsyncpa [#allocation4], 0
    // Predicated region
    $region2: #{tpu_custom_call.1} parent=1 // pred_check
      _
    $region3: #{tpu_custom_call.1} parent=1 // pred_check_branch
      %17 = sbr.rel (0) target = $region5
    $region4: #{tpu_custom_call.1} parent=1 // pred_region
      %s19 = ssub.s32 128, 128
      %20 = vsyncadd [#allocation3], %s19
      %s22 = sshll.u32 [#allocation2], 4
      %s23 = int_to_ptr.vmem [resolvable:$true] %s22
      %25 = dma.hbm_to_vmem [thread:$0]  %s0, 128, %s23, [#allocation3]
    $region5: #{tpu_custom_call.1} parent=1 // pred_fallthru
      _
    // Predicated region
    $region6: #{tpu_custom_call.1} parent=1 // pred_check
      _
    $region7: #{tpu_custom_call.1} parent=1 // pred_check_branch
      %27 = sbr.rel (0) target = $region9
    $region8: #{tpu_custom_call.1} parent=1 // pred_region
      %s29 = ssub.s32 2048, 2048
      %30 = vsyncadd [#allocation6], %s29
      %s31 = sshll.u32 [#allocation5], 4
      %s32 = int_to_ptr.vmem [resolvable:$true] %s31
      %37 = dma.hbm_to_vmem [thread:$0]  %s1, 2048, %s32, [#allocation6], 128, 128, 8
    $region9: #{tpu_custom_call.1} parent=1 // pred_fallthru
      _
    // Predicated region
    $region10: #{tpu_custom_call.1} parent=1 // pred_check
      _
    $region11: #{tpu_custom_call.1} parent=1 // pred_check_branch
      %39 = sbr.rel (0) target = $region13
    $region12: #{tpu_custom_call.1} parent=1 // pred_region
      _
    $region13: #{tpu_custom_call.1} parent=1 // pred_fallthru
      _
    // Predicated region
    $region14: #{tpu_custom_call.1} parent=1 // pred_check
      _
    $region15: #{tpu_custom_call.1} parent=1 // pred_check_branch
      %41 = sbr.rel (0) target = $region17
    $region16: #{tpu_custom_call.1} parent=1 // pred_region
      %s43 = ssub.s32 2048, 2048
      %44 = vsyncadd [#allocation6], %s43
      %s45 = sshll.u32 [#allocation7], 4
      %s46 = int_to_ptr.vmem [resolvable:$true] %s45
      %51 = dma.hbm_to_vmem [thread:$0]  %s3, 2048, %s46, [#allocation6], 128, 128, 8
    $region17: #{tpu_custom_call.1} parent=1 // pred_fallthru
      _
    // Predicated region
    $region18: #{tpu_custom_call.1} parent=1 // pred_check
      _
    $region19: #{tpu_custom_call.1} parent=1 // pred_check_branch
      %53 = sbr.rel (0) target = $region21
    $region20: #{tpu_custom_call.1} parent=1 // pred_region
      _
    $region21: #{tpu_custom_call.1} parent=1 // pred_fallthru
      _
    // Predicated region
    $region22: #{tpu_custom_call.1} parent=1 // pred_check
      _
    $region23: #{tpu_custom_call.1} parent=1 // pred_check_branch
      %55 = sbr.rel (0) target = $region25
    $region24: #{tpu_custom_call.1} parent=1 // pred_region
      %s57 = ssub.s32 2048, 2048
      %58 = vsyncadd [#allocation9], %s57
      %s59 = sshll.u32 [#allocation8], 4
      %s60 = int_to_ptr.vmem [resolvable:$true] %s59
      %65 = dma.hbm_to_vmem [thread:$0]  %s5, 2048, %s60, [#allocation9], 128, 128, 8
    $region25: #{tpu_custom_call.1} parent=1 // pred_fallthru
      _
    // Predicated region
    $region26: #{tpu_custom_call.1} parent=1 // pred_check
      _
    $region27: #{tpu_custom_call.1} parent=1 // pred_check_branch
      %67 = sbr.rel (0) target = $region29
    $region28: #{tpu_custom_call.1} parent=1 // pred_region
      _
    $region29: #{tpu_custom_call.1} parent=1 // pred_fallthru
      _
    // Predicated region
    $region30: #{tpu_custom_call.1} parent=1 // pred_check
      _
    $region31: #{tpu_custom_call.1} parent=1 // pred_check_branch
      %69 = sbr.rel (0) target = $region33
    $region32: #{tpu_custom_call.1} parent=1 // pred_region
      %70 = dma.done [#allocation3], 128
    $region33: #{tpu_custom_call.1} parent=1 // pred_fallthru
      _
    // Predicated region
    $region34: #{tpu_custom_call.1} parent=1 // pred_check
      _
    $region35: #{tpu_custom_call.1} parent=1 // pred_check_branch
      %72 = sbr.rel (0) target = $region37
    $region36: #{tpu_custom_call.1} parent=1 // pred_region
      %73 = dma.done [#allocation6], 2048
    $region37: #{tpu_custom_call.1} parent=1 // pred_fallthru
      _
    // Predicated region
    $region38: #{tpu_custom_call.1} parent=1 // pred_check
      _
    $region39: #{tpu_custom_call.1} parent=1 // pred_check_branch
      %75 = sbr.rel (0) target = $region41
    $region40: #{tpu_custom_call.1} parent=1 // pred_region
      %76 = dma.done [#allocation6], 2048
    $region41: #{tpu_custom_call.1} parent=1 // pred_fallthru
      _
    // Predicated region
    $region42: #{tpu_custom_call.1} parent=1 // pred_check
      _
    $region43: #{tpu_custom_call.1} parent=1 // pred_check_branch
      %78 = sbr.rel (0) target = $region45
    $region44: #{tpu_custom_call.1} parent=1 // pred_region
      %79 = dma.done [#allocation9], 2048
    $region45: #{tpu_custom_call.1} parent=1 // pred_fallthru
      _
    %v80 = vld [vmem:[#allocation2] sm:$0xff]
    %v81 = vld [vmem:[#allocation5] sm:$0xff]
    %v82 = vld [vmem:[#allocation5 + $0x8] sm:$0xff]
    %v83 = vld [vmem:[#allocation5 + $0x10] sm:$0xff]
    %v84 = vld [vmem:[#allocation5 + $0x18] sm:$0xff]
    %v85 = vld [vmem:[#allocation5 + $0x20] sm:$0xff]
    %v86 = vld [vmem:[#allocation5 + $0x28] sm:$0xff]
    %v87 = vld [vmem:[#allocation5 + $0x30] sm:$0xff]
    %v88 = vld [vmem:[#allocation5 + $0x38] sm:$0xff]
    %v89 = vld [vmem:[#allocation5 + $0x40] sm:$0xff]
    %v90 = vld [vmem:[#allocation5 + $0x48] sm:$0xff]
    %v91 = vld [vmem:[#allocation5 + $0x50] sm:$0xff]
    %v92 = vld [vmem:[#allocation5 + $0x58] sm:$0xff]
    %v93 = vld [vmem:[#allocation5 + $0x60] sm:$0xff]
    %v94 = vld [vmem:[#allocation5 + $0x68] sm:$0xff]
    %v95 = vld [vmem:[#allocation5 + $0x70] sm:$0xff]
    %v96 = vld [vmem:[#allocation5 + $0x78] sm:$0xff]
    %v97 = vld [vmem:[%s2] sm:$0x1]
    %v99 = vlaneseq
    %v100 = vshrl.u32 %v99, 7
    %v101 = vsub.s32 0, %v100
    %v102 = vrot.slane %v97, %v101
    %104 = vmatprep.subr.mxu0 0.0
    %v105 = vand.u32 %v96, 4294901760
    %106 = vmatpush1.msra.mxu0 %v105
    %107 = vmatprep.subr.mxu0 0.0
    %v108 = vand.u32 %v95, 4294901760
    %109 = vmatpush1.msra.mxu0 %v108
    %110 = vmatprep.subr.mxu0 0.0
    %v111 = vand.u32 %v94, 4294901760
    %112 = vmatpush1.msra.mxu0 %v111
    %113 = vmatprep.subr.mxu0 0.0
    %v114 = vand.u32 %v93, 4294901760
    %115 = vmatpush1.msra.mxu0 %v114
    %116 = vmatprep.subr.mxu0 0.0
    %v117 = vand.u32 %v92, 4294901760
    %118 = vmatpush1.msra.mxu0 %v117
    %119 = vmatprep.subr.mxu0 0.0
    %v120 = vand.u32 %v91, 4294901760
    %121 = vmatpush1.msra.mxu0 %v120
    %122 = vmatprep.subr.mxu0 0.0
    %v123 = vand.u32 %v90, 4294901760
    %124 = vmatpush1.msra.mxu0 %v123
    %125 = vmatprep.subr.mxu0 0.0
    %v126 = vand.u32 %v89, 4294901760
    %127 = vmatpush1.msra.mxu0 %v126
    %128 = vmatprep.subr.mxu0 0.0
    %v129 = vand.u32 %v88, 4294901760
    %130 = vmatpush1.msra.mxu0 %v129
    %131 = vmatprep.subr.mxu0 0.0
    %v132 = vand.u32 %v87, 4294901760
    %133 = vmatpush1.msra.mxu0 %v132
    %134 = vmatprep.subr.mxu0 0.0
    %v135 = vand.u32 %v86, 4294901760
    %136 = vmatpush1.msra.mxu0 %v135
    %137 = vmatprep.subr.mxu0 0.0
    %v138 = vand.u32 %v85, 4294901760
    %139 = vmatpush1.msra.mxu0 %v138
    %140 = vmatprep.subr.mxu0 0.0
    %v141 = vand.u32 %v84, 4294901760
    %142 = vmatpush1.msra.mxu0 %v141
    %143 = vmatprep.subr.mxu0 0.0
    %v144 = vand.u32 %v83, 4294901760
    %145 = vmatpush1.msra.mxu0 %v144
    %146 = vmatprep.subr.mxu0 0.0
    %v147 = vand.u32 %v82, 4294901760
    %148 = vmatpush1.msra.mxu0 %v147
    %149 = vmatprep.subr.mxu0 0.0
    %v150 = vand.u32 %v81, 4294901760
    %151 = vmatpush1.msra.mxu0 %v150
    %152 = vmatprep.subr.mxu0 0.0
    %153 = vmatpush2.msra.mxu0 0.0
    %154 = vmatprep.subr.mxu0 0.0
    %155 = vmatpush2.msra.mxu0 0.0
    %156 = vmatprep.subr.mxu0 0.0
    %157 = vmatpush2.msra.mxu0 0.0
    %158 = vmatprep.subr.mxu0 0.0
    %159 = vmatpush2.msra.mxu0 0.0
    %160 = vmatprep.subr.mxu0 0.0
    %161 = vmatpush2.msra.mxu0 0.0
    %162 = vmatprep.subr.mxu0 0.0
    %163 = vmatpush2.msra.mxu0 0.0
    %164 = vmatprep.subr.mxu0 0.0
    %165 = vmatpush2.msra.mxu0 0.0
    %166 = vmatprep.subr.mxu0 0.0
    %167 = vmatpush2.msra.mxu0 0.0
    %168 = vmatprep.subr.mxu0 0.0
    %169 = vmatpush2.msra.mxu0 0.0
    %170 = vmatprep.subr.mxu0 0.0
    %171 = vmatpush2.msra.mxu0 0.0
    %172 = vmatprep.subr.mxu0 0.0
    %173 = vmatpush2.msra.mxu0 0.0
    %174 = vmatprep.subr.mxu0 0.0
    %175 = vmatpush2.msra.mxu0 0.0
    %176 = vmatprep.subr.mxu0 0.0
    %177 = vmatpush2.msra.mxu0 0.0
    %178 = vmatprep.subr.mxu0 0.0
    %179 = vmatpush2.msra.mxu0 0.0
    %180 = vmatprep.subr.mxu0 0.0
    %181 = vmatpush2.msra.mxu0 0.0
    %182 = vmatprep.subr.mxu0 0.0
    %183 = vmatpush2.msra.mxu0 0.0
    %184 = vmatprep.mubr.f32.mxu0 0.0
    %v185 = vand.u32 %v80, 4294901760
    %v186 = vsub.f32 %v80, %v185
    %v187 = vand.u32 %v186, 4294901760
    %v188 = vsub.f32 %v186, %v187
    %v189 = vand.u32 %v188, 4294901760
    %190 = vmatmul.mubr.f32.gmra.mxu0 %v189
    %v191 = vpop.f32.mrf.mxu0
    %v192 = vadd.f32 %v102, %v191
    %v193 = vpop.f32.mrf.mxu0
    %194 = vdwg.mxu0
    %195 = vmatprep.subr.mxu0 0.0
    %v196 = vand.u32 %v96, 4294901760
    %v197 = vsub.f32 %v96, %v196
    %v198 = vand.u32 %v197, 4294901760
    %v199 = vsub.f32 %v197, %v198
    %v200 = vand.u32 %v199, 4294901760
    %201 = vmatpush1.msra.mxu0 %v200
    %202 = vmatprep.subr.mxu0 0.0
    %v203 = vand.u32 %v95, 4294901760
    %v204 = vsub.f32 %v95, %v203
    %v205 = vand.u32 %v204, 4294901760
    %v206 = vsub.f32 %v204, %v205
    %v207 = vand.u32 %v206, 4294901760
    %208 = vmatpush1.msra.mxu0 %v207
    %209 = vmatprep.subr.mxu0 0.0
    %v210 = vand.u32 %v94, 4294901760
    %v211 = vsub.f32 %v94, %v210
    %v212 = vand.u32 %v211, 4294901760
    %v213 = vsub.f32 %v211, %v212
    %v214 = vand.u32 %v213, 4294901760
    %215 = vmatpush1.msra.mxu0 %v214
    %216 = vmatprep.subr.mxu0 0.0
    %v217 = vand.u32 %v93, 4294901760
    %v218 = vsub.f32 %v93, %v217
    %v219 = vand.u32 %v218, 4294901760
    %v220 = vsub.f32 %v218, %v219
    %v221 = vand.u32 %v220, 4294901760
    %222 = vmatpush1.msra.mxu0 %v221
    %223 = vmatprep.subr.mxu0 0.0
    %v224 = vand.u32 %v92, 4294901760
    %v225 = vsub.f32 %v92, %v224
    %v226 = vand.u32 %v225, 4294901760
    %v227 = vsub.f32 %v225, %v226
    %v228 = vand.u32 %v227, 4294901760
    %229 = vmatpush1.msra.mxu0 %v228
    %230 = vmatprep.subr.mxu0 0.0
    %v231 = vand.u32 %v91, 4294901760
    %v232 = vsub.f32 %v91, %v231
    %v233 = vand.u32 %v232, 4294901760
    %v234 = vsub.f32 %v232, %v233
    %v235 = vand.u32 %v234, 4294901760
    %236 = vmatpush1.msra.mxu0 %v235
    %237 = vmatprep.subr.mxu0 0.0
    %v238 = vand.u32 %v90, 4294901760
    %v239 = vsub.f32 %v90, %v238
    %v240 = vand.u32 %v239, 4294901760
    %v241 = vsub.f32 %v239, %v240
    %v242 = vand.u32 %v241, 4294901760
    %243 = vmatpush1.msra.mxu0 %v242
    %244 = vmatprep.subr.mxu0 0.0
    %v245 = vand.u32 %v89, 4294901760
    %v246 = vsub.f32 %v89, %v245
    %v247 = vand.u32 %v246, 4294901760
    %v248 = vsub.f32 %v246, %v247
    %v249 = vand.u32 %v248, 4294901760
    %250 = vmatpush1.msra.mxu0 %v249
    %251 = vmatprep.subr.mxu0 0.0
    %v252 = vand.u32 %v88, 4294901760
    %v253 = vsub.f32 %v88, %v252
    %v254 = vand.u32 %v253, 4294901760
    %v255 = vsub.f32 %v253, %v254
    %v256 = vand.u32 %v255, 4294901760
    %257 = vmatpush1.msra.mxu0 %v256
    %258 = vmatprep.subr.mxu0 0.0
    %v259 = vand.u32 %v87, 4294901760
    %v260 = vsub.f32 %v87, %v259
    %v261 = vand.u32 %v260, 4294901760
    %v262 = vsub.f32 %v260, %v261
    %v263 = vand.u32 %v262, 4294901760
    %264 = vmatpush1.msra.mxu0 %v263
    %265 = vmatprep.subr.mxu0 0.0
    %v266 = vand.u32 %v86, 4294901760
    %v267 = vsub.f32 %v86, %v266
    %v268 = vand.u32 %v267, 4294901760
    %v269 = vsub.f32 %v267, %v268
    %v270 = vand.u32 %v269, 4294901760
    %271 = vmatpush1.msra.mxu0 %v270
    %272 = vmatprep.subr.mxu0 0.0
    %v273 = vand.u32 %v85, 4294901760
    %v274 = vsub.f32 %v85, %v273
    %v275 = vand.u32 %v274, 4294901760
    %v276 = vsub.f32 %v274, %v275
    %v277 = vand.u32 %v276, 4294901760
    %278 = vmatpush1.msra.mxu0 %v277
    %279 = vmatprep.subr.mxu0 0.0
    %v280 = vand.u32 %v84, 4294901760
    %v281 = vsub.f32 %v84, %v280
    %v282 = vand.u32 %v281, 4294901760
    %v283 = vsub.f32 %v281, %v282
    %v284 = vand.u32 %v283, 4294901760
    %285 = vmatpush1.msra.mxu0 %v284
    %286 = vmatprep.subr.mxu0 0.0
    %v287 = vand.u32 %v83, 4294901760
    %v288 = vsub.f32 %v83, %v287
    %v289 = vand.u32 %v288, 4294901760
    %v290 = vsub.f32 %v288, %v289
    %v291 = vand.u32 %v290, 4294901760
    %292 = vmatpush1.msra.mxu0 %v291
    %293 = vmatprep.subr.mxu0 0.0
    %v294 = vand.u32 %v82, 4294901760
    %v295 = vsub.f32 %v82, %v294
    %v296 = vand.u32 %v295, 4294901760
    %v297 = vsub.f32 %v295, %v296
    %v298 = vand.u32 %v297, 4294901760
    %299 = vmatpush1.msra.mxu0 %v298
    %300 = vmatprep.subr.mxu0 0.0
    %v301 = vand.u32 %v81, 4294901760
    %v302 = vsub.f32 %v81, %v301
    %v303 = vand.u32 %v302, 4294901760
    %v304 = vsub.f32 %v302, %v303
    %v305 = vand.u32 %v304, 4294901760
    %306 = vmatpush1.msra.mxu0 %v305
    %307 = vmatprep.subr.mxu0 0.0
    %308 = vmatpush2.msra.mxu0 0.0
    %309 = vmatprep.subr.mxu0 0.0
    %310 = vmatpush2.msra.mxu0 0.0
    %311 = vmatprep.subr.mxu0 0.0
    %312 = vmatpush2.msra.mxu0 0.0
    %313 = vmatprep.subr.mxu0 0.0
    %314 = vmatpush2.msra.mxu0 0.0
    %315 = vmatprep.subr.mxu0 0.0
    %316 = vmatpush2.msra.mxu0 0.0
    %317 = vmatprep.subr.mxu0 0.0
    %318 = vmatpush2.msra.mxu0 0.0
    %319 = vmatprep.subr.mxu0 0.0
    %320 = vmatpush2.msra.mxu0 0.0
    %321 = vmatprep.subr.mxu0 0.0
    %322 = vmatpush2.msra.mxu0 0.0
    %323 = vmatprep.subr.mxu0 0.0
    %324 = vmatpush2.msra.mxu0 0.0
    %325 = vmatprep.subr.mxu0 0.0
    %326 = vmatpush2.msra.mxu0 0.0
    %327 = vmatprep.subr.mxu0 0.0
    %328 = vmatpush2.msra.mxu0 0.0
    %329 = vmatprep.subr.mxu0 0.0
    %330 = vmatpush2.msra.mxu0 0.0
    %331 = vmatprep.subr.mxu0 0.0
    %332 = vmatpush2.msra.mxu0 0.0
    %333 = vmatprep.subr.mxu0 0.0
    %334 = vmatpush2.msra.mxu0 0.0
    %335 = vmatprep.subr.mxu0 0.0
    %336 = vmatpush2.msra.mxu0 0.0
    %337 = vmatprep.subr.mxu0 0.0
    %338 = vmatpush2.msra.mxu0 0.0
    %339 = vmatprep.mubr.f32.mxu0 0.0
    %v340 = vand.u32 %v80, 4294901760
    %341 = vmatmul.mubr.f32.gmra.mxu0 %v340
    %v342 = vpop.f32.mrf.mxu0
    %v343 = vadd.f32 %v192, %v342
    %v344 = vpop.f32.mrf.mxu0
    %345 = vdwg.mxu0
    %346 = vmatprep.subr.mxu0 0.0
    %v347 = vand.u32 %v96, 4294901760
    %v348 = vsub.f32 %v96, %v347
    %349 = vmatpush1.msra.mxu0 %v348
    %350 = vmatprep.subr.mxu0 0.0
    %v351 = vand.u32 %v95, 4294901760
    %v352 = vsub.f32 %v95, %v351
    %353 = vmatpush1.msra.mxu0 %v352
    %354 = vmatprep.subr.mxu0 0.0
    %v355 = vand.u32 %v94, 4294901760
    %v356 = vsub.f32 %v94, %v355
    %357 = vmatpush1.msra.mxu0 %v356
    %358 = vmatprep.subr.mxu0 0.0
    %v359 = vand.u32 %v93, 4294901760
    %v360 = vsub.f32 %v93, %v359
    %361 = vmatpush1.msra.mxu0 %v360
    %362 = vmatprep.subr.mxu0 0.0
    %v363 = vand.u32 %v92, 4294901760
    %v364 = vsub.f32 %v92, %v363
    %365 = vmatpush1.msra.mxu0 %v364
    %366 = vmatprep.subr.mxu0 0.0
    %v367 = vand.u32 %v91, 4294901760
    %v368 = vsub.f32 %v91, %v367
    %369 = vmatpush1.msra.mxu0 %v368
    %370 = vmatprep.subr.mxu0 0.0
    %v371 = vand.u32 %v90, 4294901760
    %v372 = vsub.f32 %v90, %v371
    %373 = vmatpush1.msra.mxu0 %v372
    %374 = vmatprep.subr.mxu0 0.0
    %v375 = vand.u32 %v89, 4294901760
    %v376 = vsub.f32 %v89, %v375
    %377 = vmatpush1.msra.mxu0 %v376
    %378 = vmatprep.subr.mxu0 0.0
    %v379 = vand.u32 %v88, 4294901760
    %v380 = vsub.f32 %v88, %v379
    %381 = vmatpush1.msra.mxu0 %v380
    %382 = vmatprep.subr.mxu0 0.0
    %v383 = vand.u32 %v87, 4294901760
    %v384 = vsub.f32 %v87, %v383
    %385 = vmatpush1.msra.mxu0 %v384
    %386 = vmatprep.subr.mxu0 0.0
    %v387 = vand.u32 %v86, 4294901760
    %v388 = vsub.f32 %v86, %v387
    %389 = vmatpush1.msra.mxu0 %v388
    %390 = vmatprep.subr.mxu0 0.0
    %v391 = vand.u32 %v85, 4294901760
    %v392 = vsub.f32 %v85, %v391
    %393 = vmatpush1.msra.mxu0 %v392
    %394 = vmatprep.subr.mxu0 0.0
    %v395 = vand.u32 %v84, 4294901760
    %v396 = vsub.f32 %v84, %v395
    %397 = vmatpush1.msra.mxu0 %v396
    %398 = vmatprep.subr.mxu0 0.0
    %v399 = vand.u32 %v83, 4294901760
    %v400 = vsub.f32 %v83, %v399
    %401 = vmatpush1.msra.mxu0 %v400
    %402 = vmatprep.subr.mxu0 0.0
    %v403 = vand.u32 %v82, 4294901760
    %v404 = vsub.f32 %v82, %v403
    %405 = vmatpush1.msra.mxu0 %v404
    %406 = vmatprep.subr.mxu0 0.0
    %v407 = vand.u32 %v81, 4294901760
    %v408 = vsub.f32 %v81, %v407
    %409 = vmatpush1.msra.mxu0 %v408
    %410 = vmatprep.subr.mxu0 0.0
    %411 = vmatpush2.msra.mxu0 0.0
    %412 = vmatprep.subr.mxu0 0.0
    %413 = vmatpush2.msra.mxu0 0.0
    %414 = vmatprep.subr.mxu0 0.0
    %415 = vmatpush2.msra.mxu0 0.0
    %416 = vmatprep.subr.mxu0 0.0
    %417 = vmatpush2.msra.mxu0 0.0
    %418 = vmatprep.subr.mxu0 0.0
    %419 = vmatpush2.msra.mxu0 0.0
    %420 = vmatprep.subr.mxu0 0.0
    %421 = vmatpush2.msra.mxu0 0.0
    %422 = vmatprep.subr.mxu0 0.0
    %423 = vmatpush2.msra.mxu0 0.0
    %424 = vmatprep.subr.mxu0 0.0
    %425 = vmatpush2.msra.mxu0 0.0
    %426 = vmatprep.subr.mxu0 0.0
    %427 = vmatpush2.msra.mxu0 0.0
    %428 = vmatprep.subr.mxu0 0.0
    %429 = vmatpush2.msra.mxu0 0.0
    %430 = vmatprep.subr.mxu0 0.0
    %431 = vmatpush2.msra.mxu0 0.0
    %432 = vmatprep.subr.mxu0 0.0
    %433 = vmatpush2.msra.mxu0 0.0
    %434 = vmatprep.subr.mxu0 0.0
    %435 = vmatpush2.msra.mxu0 0.0
    %436 = vmatprep.subr.mxu0 0.0
    %437 = vmatpush2.msra.mxu0 0.0
    %438 = vmatprep.subr.mxu0 0.0
    %439 = vmatpush2.msra.mxu0 0.0
    %440 = vmatprep.subr.mxu0 0.0
    %441 = vmatpush2.msra.mxu0 0.0
    %442 = vmatprep.mubr.f32.mxu0 0.0
    %v443 = vand.u32 %v80, 4294901760
    %v444 = vsub.f32 %v80, %v443
    %445 = vmatmul.mubr.f32.gmra.mxu0 %v444
    %v446 = vpop.f32.mrf.mxu0
    %v447 = vadd.f32 %v343, %v446
    %v448 = vpop.f32.mrf.mxu0
    %449 = vdwg.mxu0
    %450 = vmatprep.subr.mxu0 0.0
    %v451 = vand.u32 %v96, 4294901760
    %452 = vmatpush1.msra.mxu0 %v451
    %453 = vmatprep.subr.mxu0 0.0
    %v454 = vand.u32 %v95, 4294901760
    %455 = vmatpush1.msra.mxu0 %v454
    %456 = vmatprep.subr.mxu0 0.0
    %v457 = vand.u32 %v94, 4294901760
    %458 = vmatpush1.msra.mxu0 %v457
    %459 = vmatprep.subr.mxu0 0.0
    %v460 = vand.u32 %v93, 4294901760
    %461 = vmatpush1.msra.mxu0 %v460
    %462 = vmatprep.subr.mxu0 0.0
    %v463 = vand.u32 %v92, 4294901760
    %464 = vmatpush1.msra.mxu0 %v463
    %465 = vmatprep.subr.mxu0 0.0
    %v466 = vand.u32 %v91, 4294901760
    %467 = vmatpush1.msra.mxu0 %v466
    %468 = vmatprep.subr.mxu0 0.0
    %v469 = vand.u32 %v90, 4294901760
    %470 = vmatpush1.msra.mxu0 %v469
    %471 = vmatprep.subr.mxu0 0.0
    %v472 = vand.u32 %v89, 4294901760
    %473 = vmatpush1.msra.mxu0 %v472
    %474 = vmatprep.subr.mxu0 0.0
    %v475 = vand.u32 %v88, 4294901760
    %476 = vmatpush1.msra.mxu0 %v475
    %477 = vmatprep.subr.mxu0 0.0
    %v478 = vand.u32 %v87, 4294901760
    %479 = vmatpush1.msra.mxu0 %v478
    %480 = vmatprep.subr.mxu0 0.0
    %v481 = vand.u32 %v86, 4294901760
    %482 = vmatpush1.msra.mxu0 %v481
    %483 = vmatprep.subr.mxu0 0.0
    %v484 = vand.u32 %v85, 4294901760
    %485 = vmatpush1.msra.mxu0 %v484
    %486 = vmatprep.subr.mxu0 0.0
    %v487 = vand.u32 %v84, 4294901760
    %488 = vmatpush1.msra.mxu0 %v487
    %489 = vmatprep.subr.mxu0 0.0
    %v490 = vand.u32 %v83, 4294901760
    %491 = vmatpush1.msra.mxu0 %v490
    %492 = vmatprep.subr.mxu0 0.0
    %v493 = vand.u32 %v82, 4294901760
    %494 = vmatpush1.msra.mxu0 %v493
    %495 = vmatprep.subr.mxu0 0.0
    %v496 = vand.u32 %v81, 4294901760
    %497 = vmatpush1.msra.mxu0 %v496
    %498 = vmatprep.subr.mxu0 0.0
    %499 = vmatpush2.msra.mxu0 0.0
    %500 = vmatprep.subr.mxu0 0.0
    %501 = vmatpush2.msra.mxu0 0.0
    %502 = vmatprep.subr.mxu0 0.0
    %503 = vmatpush2.msra.mxu0 0.0
    %504 = vmatprep.subr.mxu0 0.0
    %505 = vmatpush2.msra.mxu0 0.0
    %506 = vmatprep.subr.mxu0 0.0
    %507 = vmatpush2.msra.mxu0 0.0
    %508 = vmatprep.subr.mxu0 0.0
    %509 = vmatpush2.msra.mxu0 0.0
    %510 = vmatprep.subr.mxu0 0.0
    %511 = vmatpush2.msra.mxu0 0.0
    %512 = vmatprep.subr.mxu0 0.0
    %513 = vmatpush2.msra.mxu0 0.0
    %514 = vmatprep.subr.mxu0 0.0
    %515 = vmatpush2.msra.mxu0 0.0
    %516 = vmatprep.subr.mxu0 0.0
    %517 = vmatpush2.msra.mxu0 0.0
    %518 = vmatprep.subr.mxu0 0.0
    %519 = vmatpush2.msra.mxu0 0.0
    %520 = vmatprep.subr.mxu0 0.0
    %521 = vmatpush2.msra.mxu0 0.0
    %522 = vmatprep.subr.mxu0 0.0
    %523 = vmatpush2.msra.mxu0 0.0
    %524 = vmatprep.subr.mxu0 0.0
    %525 = vmatpush2.msra.mxu0 0.0
    %526 = vmatprep.subr.mxu0 0.0
    %527 = vmatpush2.msra.mxu0 0.0
    %528 = vmatprep.subr.mxu0 0.0
    %529 = vmatpush2.msra.mxu0 0.0
    %530 = vmatprep.mubr.f32.mxu0 0.0
    %v531 = vand.u32 %v80, 4294901760
    %v532 = vsub.f32 %v80, %v531
    %v533 = vand.u32 %v532, 4294901760
    %534 = vmatmul.mubr.f32.gmra.mxu0 %v533
    %v535 = vpop.f32.mrf.mxu0
    %v536 = vadd.f32 %v447, %v535
    %v537 = vpop.f32.mrf.mxu0
    %538 = vdwg.mxu0
    %539 = vmatprep.subr.mxu0 0.0
    %v540 = vand.u32 %v96, 4294901760
    %v541 = vsub.f32 %v96, %v540
    %v542 = vand.u32 %v541, 4294901760
    %543 = vmatpush1.msra.mxu0 %v542
    %544 = vmatprep.subr.mxu0 0.0
    %v545 = vand.u32 %v95, 4294901760
    %v546 = vsub.f32 %v95, %v545
    %v547 = vand.u32 %v546, 4294901760
    %548 = vmatpush1.msra.mxu0 %v547
    %549 = vmatprep.subr.mxu0 0.0
    %v550 = vand.u32 %v94, 4294901760
    %v551 = vsub.f32 %v94, %v550
    %v552 = vand.u32 %v551, 4294901760
    %553 = vmatpush1.msra.mxu0 %v552
    %554 = vmatprep.subr.mxu0 0.0
    %v555 = vand.u32 %v93, 4294901760
    %v556 = vsub.f32 %v93, %v555
    %v557 = vand.u32 %v556, 4294901760
    %558 = vmatpush1.msra.mxu0 %v557
    %559 = vmatprep.subr.mxu0 0.0
    %v560 = vand.u32 %v92, 4294901760
    %v561 = vsub.f32 %v92, %v560
    %v562 = vand.u32 %v561, 4294901760
    %563 = vmatpush1.msra.mxu0 %v562
    %564 = vmatprep.subr.mxu0 0.0
    %v565 = vand.u32 %v91, 4294901760
    %v566 = vsub.f32 %v91, %v565
    %v567 = vand.u32 %v566, 4294901760
    %568 = vmatpush1.msra.mxu0 %v567
    %569 = vmatprep.subr.mxu0 0.0
    %v570 = vand.u32 %v90, 4294901760
    %v571 = vsub.f32 %v90, %v570
    %v572 = vand.u32 %v571, 4294901760
    %573 = vmatpush1.msra.mxu0 %v572
    %574 = vmatprep.subr.mxu0 0.0
    %v575 = vand.u32 %v89, 4294901760
    %v576 = vsub.f32 %v89, %v575
    %v577 = vand.u32 %v576, 4294901760
    %578 = vmatpush1.msra.mxu0 %v577
    %579 = vmatprep.subr.mxu0 0.0
    %v580 = vand.u32 %v88, 4294901760
    %v581 = vsub.f32 %v88, %v580
    %v582 = vand.u32 %v581, 4294901760
    %583 = vmatpush1.msra.mxu0 %v582
    %584 = vmatprep.subr.mxu0 0.0
    %v585 = vand.u32 %v87, 4294901760
    %v586 = vsub.f32 %v87, %v585
    %v587 = vand.u32 %v586, 4294901760
    %588 = vmatpush1.msra.mxu0 %v587
    %589 = vmatprep.subr.mxu0 0.0
    %v590 = vand.u32 %v86, 4294901760
    %v591 = vsub.f32 %v86, %v590
    %v592 = vand.u32 %v591, 4294901760
    %593 = vmatpush1.msra.mxu0 %v592
    %594 = vmatprep.subr.mxu0 0.0
    %v595 = vand.u32 %v85, 4294901760
    %v596 = vsub.f32 %v85, %v595
    %v597 = vand.u32 %v596, 4294901760
    %598 = vmatpush1.msra.mxu0 %v597
    %599 = vmatprep.subr.mxu0 0.0
    %v600 = vand.u32 %v84, 4294901760
    %v601 = vsub.f32 %v84, %v600
    %v602 = vand.u32 %v601, 4294901760
    %603 = vmatpush1.msra.mxu0 %v602
    %604 = vmatprep.subr.mxu0 0.0
    %v605 = vand.u32 %v83, 4294901760
    %v606 = vsub.f32 %v83, %v605
    %v607 = vand.u32 %v606, 4294901760
    %608 = vmatpush1.msra.mxu0 %v607
    %609 = vmatprep.subr.mxu0 0.0
    %v610 = vand.u32 %v82, 4294901760
    %v611 = vsub.f32 %v82, %v610
    %v612 = vand.u32 %v611, 4294901760
    %613 = vmatpush1.msra.mxu0 %v612
    %614 = vmatprep.subr.mxu0 0.0
    %v615 = vand.u32 %v81, 4294901760
    %v616 = vsub.f32 %v81, %v615
    %v617 = vand.u32 %v616, 4294901760
    %618 = vmatpush1.msra.mxu0 %v617
    %619 = vmatprep.subr.mxu0 0.0
    %620 = vmatpush2.msra.mxu0 0.0
    %621 = vmatprep.subr.mxu0 0.0
    %622 = vmatpush2.msra.mxu0 0.0
    %623 = vmatprep.subr.mxu0 0.0
    %624 = vmatpush2.msra.mxu0 0.0
    %625 = vmatprep.subr.mxu0 0.0
    %626 = vmatpush2.msra.mxu0 0.0
    %627 = vmatprep.subr.mxu0 0.0
    %628 = vmatpush2.msra.mxu0 0.0
    %629 = vmatprep.subr.mxu0 0.0
    %630 = vmatpush2.msra.mxu0 0.0
    %631 = vmatprep.subr.mxu0 0.0
    %632 = vmatpush2.msra.mxu0 0.0
    %633 = vmatprep.subr.mxu0 0.0
    %634 = vmatpush2.msra.mxu0 0.0
    %635 = vmatprep.subr.mxu0 0.0
    %636 = vmatpush2.msra.mxu0 0.0
    %637 = vmatprep.subr.mxu0 0.0
    %638 = vmatpush2.msra.mxu0 0.0
    %639 = vmatprep.subr.mxu0 0.0
    %640 = vmatpush2.msra.mxu0 0.0
    %641 = vmatprep.subr.mxu0 0.0
    %642 = vmatpush2.msra.mxu0 0.0
    %643 = vmatprep.subr.mxu0 0.0
    %644 = vmatpush2.msra.mxu0 0.0
    %645 = vmatprep.subr.mxu0 0.0
    %646 = vmatpush2.msra.mxu0 0.0
    %647 = vmatprep.subr.mxu0 0.0
    %648 = vmatpush2.msra.mxu0 0.0
    %649 = vmatprep.subr.mxu0 0.0
    %650 = vmatpush2.msra.mxu0 0.0
    %651 = vmatprep.mubr.f32.mxu0 0.0
    %v652 = vand.u32 %v80, 4294901760
    %653 = vmatmul.mubr.f32.gmra.mxu0 %v652
    %v654 = vpop.f32.mrf.mxu0
    %v655 = vadd.f32 %v536, %v654
    %v656 = vpop.f32.mrf.mxu0
    %657 = vdwg.mxu0
    %658 = vmatprep.subr.mxu0 0.0
    %v659 = vand.u32 %v96, 4294901760
    %660 = vmatpush1.msra.mxu0 %v659
    %661 = vmatprep.subr.mxu0 0.0
    %v662 = vand.u32 %v95, 4294901760
    %663 = vmatpush1.msra.mxu0 %v662
    %664 = vmatprep.subr.mxu0 0.0
    %v665 = vand.u32 %v94, 4294901760
    %666 = vmatpush1.msra.mxu0 %v665
    %667 = vmatprep.subr.mxu0 0.0
    %v668 = vand.u32 %v93, 4294901760
    %669 = vmatpush1.msra.mxu0 %v668
    %670 = vmatprep.subr.mxu0 0.0
    %v671 = vand.u32 %v92, 4294901760
    %672 = vmatpush1.msra.mxu0 %v671
    %673 = vmatprep.subr.mxu0 0.0
    %v674 = vand.u32 %v91, 4294901760
    %675 = vmatpush1.msra.mxu0 %v674
    %676 = vmatprep.subr.mxu0 0.0
    %v677 = vand.u32 %v90, 4294901760
    %678 = vmatpush1.msra.mxu0 %v677
    %679 = vmatprep.subr.mxu0 0.0
    %v680 = vand.u32 %v89, 4294901760
    %681 = vmatpush1.msra.mxu0 %v680
    %682 = vmatprep.subr.mxu0 0.0
    %v683 = vand.u32 %v88, 4294901760
    %684 = vmatpush1.msra.mxu0 %v683
    %685 = vmatprep.subr.mxu0 0.0
    %v686 = vand.u32 %v87, 4294901760
    %687 = vmatpush1.msra.mxu0 %v686
    %688 = vmatprep.subr.mxu0 0.0
    %v689 = vand.u32 %v86, 4294901760
    %690 = vmatpush1.msra.mxu0 %v689
    %691 = vmatprep.subr.mxu0 0.0
    %v692 = vand.u32 %v85, 4294901760
    %693 = vmatpush1.msra.mxu0 %v692
    %694 = vmatprep.subr.mxu0 0.0
    %v695 = vand.u32 %v84, 4294901760
    %696 = vmatpush1.msra.mxu0 %v695
    %697 = vmatprep.subr.mxu0 0.0
    %v698 = vand.u32 %v83, 4294901760
    %699 = vmatpush1.msra.mxu0 %v698
    %700 = vmatprep.subr.mxu0 0.0
    %v701 = vand.u32 %v82, 4294901760
    %702 = vmatpush1.msra.mxu0 %v701
    %703 = vmatprep.subr.mxu0 0.0
    %v704 = vand.u32 %v81, 4294901760
    %705 = vmatpush1.msra.mxu0 %v704
    %706 = vmatprep.subr.mxu0 0.0
    %707 = vmatpush2.msra.mxu0 0.0
    %708 = vmatprep.subr.mxu0 0.0
    %709 = vmatpush2.msra.mxu0 0.0
    %710 = vmatprep.subr.mxu0 0.0
    %711 = vmatpush2.msra.mxu0 0.0
    %712 = vmatprep.subr.mxu0 0.0
    %713 = vmatpush2.msra.mxu0 0.0
    %714 = vmatprep.subr.mxu0 0.0
    %715 = vmatpush2.msra.mxu0 0.0
    %716 = vmatprep.subr.mxu0 0.0
    %717 = vmatpush2.msra.mxu0 0.0
    %718 = vmatprep.subr.mxu0 0.0
    %719 = vmatpush2.msra.mxu0 0.0
    %720 = vmatprep.subr.mxu0 0.0
    %721 = vmatpush2.msra.mxu0 0.0
    %722 = vmatprep.subr.mxu0 0.0
    %723 = vmatpush2.msra.mxu0 0.0
    %724 = vmatprep.subr.mxu0 0.0
    %725 = vmatpush2.msra.mxu0 0.0
    %726 = vmatprep.subr.mxu0 0.0
    %727 = vmatpush2.msra.mxu0 0.0
    %728 = vmatprep.subr.mxu0 0.0
    %729 = vmatpush2.msra.mxu0 0.0
    %730 = vmatprep.subr.mxu0 0.0
    %731 = vmatpush2.msra.mxu0 0.0
    %732 = vmatprep.subr.mxu0 0.0
    %733 = vmatpush2.msra.mxu0 0.0
    %734 = vmatprep.subr.mxu0 0.0
    %735 = vmatpush2.msra.mxu0 0.0
    %736 = vmatprep.subr.mxu0 0.0
    %737 = vmatpush2.msra.mxu0 0.0
    %738 = vmatprep.mubr.f32.mxu0 0.0
    %v739 = vand.u32 %v80, 4294901760
    %740 = vmatmul.mubr.f32.gmra.mxu0 %v739
    %v741 = vpop.f32.mrf.mxu0
    %v742 = vadd.f32 %v655, %v741
    %v743 = vpop.f32.mrf.mxu0
    %744 = vdwg.mxu0
    %v745 = vmul.f32 %v742, %v742
    %746 = vadd.xlane.f32.xlu0 %v745
    %v747 = vpop.xlane.xlu0 %746
    %v748 = vmax.f32 %v747, 1e-24
    %v749 = vrsqrt.pop %v748
    %v750 = vmul.f32 %v742, %v749
    %v751 = vld [vmem:[#allocation7] sm:$0xff]
    %v752 = vld [vmem:[#allocation7 + $0x8] sm:$0xff]
    %v753 = vld [vmem:[#allocation7 + $0x10] sm:$0xff]
    %v754 = vld [vmem:[#allocation7 + $0x18] sm:$0xff]
    %v755 = vld [vmem:[#allocation7 + $0x20] sm:$0xff]
    %v756 = vld [vmem:[#allocation7 + $0x28] sm:$0xff]
    %v757 = vld [vmem:[#allocation7 + $0x30] sm:$0xff]
    %v758 = vld [vmem:[#allocation7 + $0x38] sm:$0xff]
    %v759 = vld [vmem:[#allocation7 + $0x40] sm:$0xff]
    %v760 = vld [vmem:[#allocation7 + $0x48] sm:$0xff]
    %v761 = vld [vmem:[#allocation7 + $0x50] sm:$0xff]
    %v762 = vld [vmem:[#allocation7 + $0x58] sm:$0xff]
    %v763 = vld [vmem:[#allocation7 + $0x60] sm:$0xff]
    %v764 = vld [vmem:[#allocation7 + $0x68] sm:$0xff]
    %v765 = vld [vmem:[#allocation7 + $0x70] sm:$0xff]
    %v766 = vld [vmem:[#allocation7 + $0x78] sm:$0xff]
    %v767 = vld [vmem:[%s4] sm:$0x1]
    %v769 = vlaneseq
    %v770 = vshrl.u32 %v769, 7
    %v771 = vsub.s32 0, %v770
    %v772 = vrot.slane %v767, %v771
    %774 = vmatprep.subr.mxu0 0.0
    %v775 = vand.u32 %v766, 4294901760
    %776 = vmatpush1.msra.mxu0 %v775
    %777 = vmatprep.subr.mxu0 0.0
    %v778 = vand.u32 %v765, 4294901760
    %779 = vmatpush1.msra.mxu0 %v778
    %780 = vmatprep.subr.mxu0 0.0
    %v781 = vand.u32 %v764, 4294901760
    %782 = vmatpush1.msra.mxu0 %v781
    %783 = vmatprep.subr.mxu0 0.0
    %v784 = vand.u32 %v763, 4294901760
    %785 = vmatpush1.msra.mxu0 %v784
    %786 = vmatprep.subr.mxu0 0.0
    %v787 = vand.u32 %v762, 4294901760
    %788 = vmatpush1.msra.mxu0 %v787
    %789 = vmatprep.subr.mxu0 0.0
    %v790 = vand.u32 %v761, 4294901760
    %791 = vmatpush1.msra.mxu0 %v790
    %792 = vmatprep.subr.mxu0 0.0
    %v793 = vand.u32 %v760, 4294901760
    %794 = vmatpush1.msra.mxu0 %v793
    %795 = vmatprep.subr.mxu0 0.0
    %v796 = vand.u32 %v759, 4294901760
    %797 = vmatpush1.msra.mxu0 %v796
    %798 = vmatprep.subr.mxu0 0.0
    %v799 = vand.u32 %v758, 4294901760
    %800 = vmatpush1.msra.mxu0 %v799
    %801 = vmatprep.subr.mxu0 0.0
    %v802 = vand.u32 %v757, 4294901760
    %803 = vmatpush1.msra.mxu0 %v802
    %804 = vmatprep.subr.mxu0 0.0
    %v805 = vand.u32 %v756, 4294901760
    %806 = vmatpush1.msra.mxu0 %v805
    %807 = vmatprep.subr.mxu0 0.0
    %v808 = vand.u32 %v755, 4294901760
    %809 = vmatpush1.msra.mxu0 %v808
    %810 = vmatprep.subr.mxu0 0.0
    %v811 = vand.u32 %v754, 4294901760
    %812 = vmatpush1.msra.mxu0 %v811
    %813 = vmatprep.subr.mxu0 0.0
    %v814 = vand.u32 %v753, 4294901760
    %815 = vmatpush1.msra.mxu0 %v814
    %816 = vmatprep.subr.mxu0 0.0
    %v817 = vand.u32 %v752, 4294901760
    %818 = vmatpush1.msra.mxu0 %v817
    %819 = vmatprep.subr.mxu0 0.0
    %v820 = vand.u32 %v751, 4294901760
    %821 = vmatpush1.msra.mxu0 %v820
    %822 = vmatprep.subr.mxu0 0.0
    %823 = vmatpush2.msra.mxu0 0.0
    %824 = vmatprep.subr.mxu0 0.0
    %825 = vmatpush2.msra.mxu0 0.0
    %826 = vmatprep.subr.mxu0 0.0
    %827 = vmatpush2.msra.mxu0 0.0
    %828 = vmatprep.subr.mxu0 0.0
    %829 = vmatpush2.msra.mxu0 0.0
    %830 = vmatprep.subr.mxu0 0.0
    %831 = vmatpush2.msra.mxu0 0.0
    %832 = vmatprep.subr.mxu0 0.0
    %833 = vmatpush2.msra.mxu0 0.0
    %834 = vmatprep.subr.mxu0 0.0
    %835 = vmatpush2.msra.mxu0 0.0
    %836 = vmatprep.subr.mxu0 0.0
    %837 = vmatpush2.msra.mxu0 0.0
    %838 = vmatprep.subr.mxu0 0.0
    %839 = vmatpush2.msra.mxu0 0.0
    %840 = vmatprep.subr.mxu0 0.0
    %841 = vmatpush2.msra.mxu0 0.0
    %842 = vmatprep.subr.mxu0 0.0
    %843 = vmatpush2.msra.mxu0 0.0
    %844 = vmatprep.subr.mxu0 0.0
    %845 = vmatpush2.msra.mxu0 0.0
    %846 = vmatprep.subr.mxu0 0.0
    %847 = vmatpush2.msra.mxu0 0.0
    %848 = vmatprep.subr.mxu0 0.0
    %849 = vmatpush2.msra.mxu0 0.0
    %850 = vmatprep.subr.mxu0 0.0
    %851 = vmatpush2.msra.mxu0 0.0
    %852 = vmatprep.subr.mxu0 0.0
    %853 = vmatpush2.msra.mxu0 0.0
    %854 = vmatprep.mubr.f32.mxu0 0.0
    %v855 = vand.u32 %v750, 4294901760
    %v856 = vsub.f32 %v750, %v855
    %v857 = vand.u32 %v856, 4294901760
    %v858 = vsub.f32 %v856, %v857
    %v859 = vand.u32 %v858, 4294901760
    %860 = vmatmul.mubr.f32.gmra.mxu0 %v859
    %v861 = vpop.f32.mrf.mxu0
    %v862 = vadd.f32 %v772, %v861
    %v863 = vpop.f32.mrf.mxu0
    %864 = vdwg.mxu0
    %865 = vmatprep.subr.mxu0 0.0
    %v866 = vand.u32 %v766, 4294901760
    %v867 = vsub.f32 %v766, %v866
    %v868 = vand.u32 %v867, 4294901760
    %v869 = vsub.f32 %v867, %v868
    %v870 = vand.u32 %v869, 4294901760
    %871 = vmatpush1.msra.mxu0 %v870
    %872 = vmatprep.subr.mxu0 0.0
    %v873 = vand.u32 %v765, 4294901760
    %v874 = vsub.f32 %v765, %v873
    %v875 = vand.u32 %v874, 4294901760
    %v876 = vsub.f32 %v874, %v875
    %v877 = vand.u32 %v876, 4294901760
    %878 = vmatpush1.msra.mxu0 %v877
    %879 = vmatprep.subr.mxu0 0.0
    %v880 = vand.u32 %v764, 4294901760
    %v881 = vsub.f32 %v764, %v880
    %v882 = vand.u32 %v881, 4294901760
    %v883 = vsub.f32 %v881, %v882
    %v884 = vand.u32 %v883, 4294901760
    %885 = vmatpush1.msra.mxu0 %v884
    %886 = vmatprep.subr.mxu0 0.0
    %v887 = vand.u32 %v763, 4294901760
    %v888 = vsub.f32 %v763, %v887
    %v889 = vand.u32 %v888, 4294901760
    %v890 = vsub.f32 %v888, %v889
    %v891 = vand.u32 %v890, 4294901760
    %892 = vmatpush1.msra.mxu0 %v891
    %893 = vmatprep.subr.mxu0 0.0
    %v894 = vand.u32 %v762, 4294901760
    %v895 = vsub.f32 %v762, %v894
    %v896 = vand.u32 %v895, 4294901760
    %v897 = vsub.f32 %v895, %v896
    %v898 = vand.u32 %v897, 4294901760
    %899 = vmatpush1.msra.mxu0 %v898
    %900 = vmatprep.subr.mxu0 0.0
    %v901 = vand.u32 %v761, 4294901760
    %v902 = vsub.f32 %v761, %v901
    %v903 = vand.u32 %v902, 4294901760
    %v904 = vsub.f32 %v902, %v903
    %v905 = vand.u32 %v904, 4294901760
    %906 = vmatpush1.msra.mxu0 %v905
    %907 = vmatprep.subr.mxu0 0.0
    %v908 = vand.u32 %v760, 4294901760
    %v909 = vsub.f32 %v760, %v908
    %v910 = vand.u32 %v909, 4294901760
    %v911 = vsub.f32 %v909, %v910
    %v912 = vand.u32 %v911, 4294901760
    %913 = vmatpush1.msra.mxu0 %v912
    %914 = vmatprep.subr.mxu0 0.0
    %v915 = vand.u32 %v759, 4294901760
    %v916 = vsub.f32 %v759, %v915
    %v917 = vand.u32 %v916, 4294901760
    %v918 = vsub.f32 %v916, %v917
    %v919 = vand.u32 %v918, 4294901760
    %920 = vmatpush1.msra.mxu0 %v919
    %921 = vmatprep.subr.mxu0 0.0
    %v922 = vand.u32 %v758, 4294901760
    %v923 = vsub.f32 %v758, %v922
    %v924 = vand.u32 %v923, 4294901760
    %v925 = vsub.f32 %v923, %v924
    %v926 = vand.u32 %v925, 4294901760
    %927 = vmatpush1.msra.mxu0 %v926
    %928 = vmatprep.subr.mxu0 0.0
    %v929 = vand.u32 %v757, 4294901760
    %v930 = vsub.f32 %v757, %v929
    %v931 = vand.u32 %v930, 4294901760
    %v932 = vsub.f32 %v930, %v931
    %v933 = vand.u32 %v932, 4294901760
    %934 = vmatpush1.msra.mxu0 %v933
    %935 = vmatprep.subr.mxu0 0.0
    %v936 = vand.u32 %v756, 4294901760
    %v937 = vsub.f32 %v756, %v936
    %v938 = vand.u32 %v937, 4294901760
    %v939 = vsub.f32 %v937, %v938
    %v940 = vand.u32 %v939, 4294901760
    %941 = vmatpush1.msra.mxu0 %v940
    %942 = vmatprep.subr.mxu0 0.0
    %v943 = vand.u32 %v755, 4294901760
    %v944 = vsub.f32 %v755, %v943
    %v945 = vand.u32 %v944, 4294901760
    %v946 = vsub.f32 %v944, %v945
    %v947 = vand.u32 %v946, 4294901760
    %948 = vmatpush1.msra.mxu0 %v947
    %949 = vmatprep.subr.mxu0 0.0
    %v950 = vand.u32 %v754, 4294901760
    %v951 = vsub.f32 %v754, %v950
    %v952 = vand.u32 %v951, 4294901760
    %v953 = vsub.f32 %v951, %v952
    %v954 = vand.u32 %v953, 4294901760
    %955 = vmatpush1.msra.mxu0 %v954
    %956 = vmatprep.subr.mxu0 0.0
    %v957 = vand.u32 %v753, 4294901760
    %v958 = vsub.f32 %v753, %v957
    %v959 = vand.u32 %v958, 4294901760
    %v960 = vsub.f32 %v958, %v959
    %v961 = vand.u32 %v960, 4294901760
    %962 = vmatpush1.msra.mxu0 %v961
    %963 = vmatprep.subr.mxu0 0.0
    %v964 = vand.u32 %v752, 4294901760
    %v965 = vsub.f32 %v752, %v964
    %v966 = vand.u32 %v965, 4294901760
    %v967 = vsub.f32 %v965, %v966
    %v968 = vand.u32 %v967, 4294901760
    %969 = vmatpush1.msra.mxu0 %v968
    %970 = vmatprep.subr.mxu0 0.0
    %v971 = vand.u32 %v751, 4294901760
    %v972 = vsub.f32 %v751, %v971
    %v973 = vand.u32 %v972, 4294901760
    %v974 = vsub.f32 %v972, %v973
    %v975 = vand.u32 %v974, 4294901760
    %976 = vmatpush1.msra.mxu0 %v975
    %977 = vmatprep.subr.mxu0 0.0
    %978 = vmatpush2.msra.mxu0 0.0
    %979 = vmatprep.subr.mxu0 0.0
    %980 = vmatpush2.msra.mxu0 0.0
    %981 = vmatprep.subr.mxu0 0.0
    %982 = vmatpush2.msra.mxu0 0.0
    %983 = vmatprep.subr.mxu0 0.0
    %984 = vmatpush2.msra.mxu0 0.0
    %985 = vmatprep.subr.mxu0 0.0
    %986 = vmatpush2.msra.mxu0 0.0
    %987 = vmatprep.subr.mxu0 0.0
    %988 = vmatpush2.msra.mxu0 0.0
    %989 = vmatprep.subr.mxu0 0.0
    %990 = vmatpush2.msra.mxu0 0.0
    %991 = vmatprep.subr.mxu0 0.0
    %992 = vmatpush2.msra.mxu0 0.0
    %993 = vmatprep.subr.mxu0 0.0
    %994 = vmatpush2.msra.mxu0 0.0
    %995 = vmatprep.subr.mxu0 0.0
    %996 = vmatpush2.msra.mxu0 0.0
    %997 = vmatprep.subr.mxu0 0.0
    %998 = vmatpush2.msra.mxu0 0.0
    %999 = vmatprep.subr.mxu0 0.0
    %1000 = vmatpush2.msra.mxu0 0.0
    %1001 = vmatprep.subr.mxu0 0.0
    %1002 = vmatpush2.msra.mxu0 0.0
    %1003 = vmatprep.subr.mxu0 0.0
    %1004 = vmatpush2.msra.mxu0 0.0
    %1005 = vmatprep.subr.mxu0 0.0
    %1006 = vmatpush2.msra.mxu0 0.0
    %1007 = vmatprep.subr.mxu0 0.0
    %1008 = vmatpush2.msra.mxu0 0.0
    %1009 = vmatprep.mubr.f32.mxu0 0.0
    %v1010 = vand.u32 %v750, 4294901760
    %1011 = vmatmul.mubr.f32.gmra.mxu0 %v1010
    %v1012 = vpop.f32.mrf.mxu0
    %v1013 = vadd.f32 %v862, %v1012
    %v1014 = vpop.f32.mrf.mxu0
    %1015 = vdwg.mxu0
    %1016 = vmatprep.subr.mxu0 0.0
    %v1017 = vand.u32 %v766, 4294901760
    %v1018 = vsub.f32 %v766, %v1017
    %1019 = vmatpush1.msra.mxu0 %v1018
    %1020 = vmatprep.subr.mxu0 0.0
    %v1021 = vand.u32 %v765, 4294901760
    %v1022 = vsub.f32 %v765, %v1021
    %1023 = vmatpush1.msra.mxu0 %v1022
    %1024 = vmatprep.subr.mxu0 0.0
    %v1025 = vand.u32 %v764, 4294901760
    %v1026 = vsub.f32 %v764, %v1025
    %1027 = vmatpush1.msra.mxu0 %v1026
    %1028 = vmatprep.subr.mxu0 0.0
    %v1029 = vand.u32 %v763, 4294901760
    %v1030 = vsub.f32 %v763, %v1029
    %1031 = vmatpush1.msra.mxu0 %v1030
    %1032 = vmatprep.subr.mxu0 0.0
    %v1033 = vand.u32 %v762, 4294901760
    %v1034 = vsub.f32 %v762, %v1033
    %1035 = vmatpush1.msra.mxu0 %v1034
    %1036 = vmatprep.subr.mxu0 0.0
    %v1037 = vand.u32 %v761, 4294901760
    %v1038 = vsub.f32 %v761, %v1037
    %1039 = vmatpush1.msra.mxu0 %v1038
    %1040 = vmatprep.subr.mxu0 0.0
    %v1041 = vand.u32 %v760, 4294901760
    %v1042 = vsub.f32 %v760, %v1041
    %1043 = vmatpush1.msra.mxu0 %v1042
    %1044 = vmatprep.subr.mxu0 0.0
    %v1045 = vand.u32 %v759, 4294901760
    %v1046 = vsub.f32 %v759, %v1045
    %1047 = vmatpush1.msra.mxu0 %v1046
    %1048 = vmatprep.subr.mxu0 0.0
    %v1049 = vand.u32 %v758, 4294901760
    %v1050 = vsub.f32 %v758, %v1049
    %1051 = vmatpush1.msra.mxu0 %v1050
    %1052 = vmatprep.subr.mxu0 0.0
    %v1053 = vand.u32 %v757, 4294901760
    %v1054 = vsub.f32 %v757, %v1053
    %1055 = vmatpush1.msra.mxu0 %v1054
    %1056 = vmatprep.subr.mxu0 0.0
    %v1057 = vand.u32 %v756, 4294901760
    %v1058 = vsub.f32 %v756, %v1057
    %1059 = vmatpush1.msra.mxu0 %v1058
    %1060 = vmatprep.subr.mxu0 0.0
    %v1061 = vand.u32 %v755, 4294901760
    %v1062 = vsub.f32 %v755, %v1061
    %1063 = vmatpush1.msra.mxu0 %v1062
    %1064 = vmatprep.subr.mxu0 0.0
    %v1065 = vand.u32 %v754, 4294901760
    %v1066 = vsub.f32 %v754, %v1065
    %1067 = vmatpush1.msra.mxu0 %v1066
    %1068 = vmatprep.subr.mxu0 0.0
    %v1069 = vand.u32 %v753, 4294901760
    %v1070 = vsub.f32 %v753, %v1069
    %1071 = vmatpush1.msra.mxu0 %v1070
    %1072 = vmatprep.subr.mxu0 0.0
    %v1073 = vand.u32 %v752, 4294901760
    %v1074 = vsub.f32 %v752, %v1073
    %1075 = vmatpush1.msra.mxu0 %v1074
    %1076 = vmatprep.subr.mxu0 0.0
    %v1077 = vand.u32 %v751, 4294901760
    %v1078 = vsub.f32 %v751, %v1077
    %1079 = vmatpush1.msra.mxu0 %v1078
    %1080 = vmatprep.subr.mxu0 0.0
    %1081 = vmatpush2.msra.mxu0 0.0
    %1082 = vmatprep.subr.mxu0 0.0
    %1083 = vmatpush2.msra.mxu0 0.0
    %1084 = vmatprep.subr.mxu0 0.0
    %1085 = vmatpush2.msra.mxu0 0.0
    %1086 = vmatprep.subr.mxu0 0.0
    %1087 = vmatpush2.msra.mxu0 0.0
    %1088 = vmatprep.subr.mxu0 0.0
    %1089 = vmatpush2.msra.mxu0 0.0
    %1090 = vmatprep.subr.mxu0 0.0
    %1091 = vmatpush2.msra.mxu0 0.0
    %1092 = vmatprep.subr.mxu0 0.0
    %1093 = vmatpush2.msra.mxu0 0.0
    %1094 = vmatprep.subr.mxu0 0.0
    %1095 = vmatpush2.msra.mxu0 0.0
    %1096 = vmatprep.subr.mxu0 0.0
    %1097 = vmatpush2.msra.mxu0 0.0
    %1098 = vmatprep.subr.mxu0 0.0
    %1099 = vmatpush2.msra.mxu0 0.0
    %1100 = vmatprep.subr.mxu0 0.0
    %1101 = vmatpush2.msra.mxu0 0.0
    %1102 = vmatprep.subr.mxu0 0.0
    %1103 = vmatpush2.msra.mxu0 0.0
    %1104 = vmatprep.subr.mxu0 0.0
    %1105 = vmatpush2.msra.mxu0 0.0
    %1106 = vmatprep.subr.mxu0 0.0
    %1107 = vmatpush2.msra.mxu0 0.0
    %1108 = vmatprep.subr.mxu0 0.0
    %1109 = vmatpush2.msra.mxu0 0.0
    %1110 = vmatprep.subr.mxu0 0.0
    %1111 = vmatpush2.msra.mxu0 0.0
    %1112 = vmatprep.mubr.f32.mxu0 0.0
    %v1113 = vand.u32 %v750, 4294901760
    %v1114 = vsub.f32 %v750, %v1113
    %1115 = vmatmul.mubr.f32.gmra.mxu0 %v1114
    %v1116 = vpop.f32.mrf.mxu0
    %v1117 = vadd.f32 %v1013, %v1116
    %v1118 = vpop.f32.mrf.mxu0
    %1119 = vdwg.mxu0
    %1120 = vmatprep.subr.mxu0 0.0
    %v1121 = vand.u32 %v766, 4294901760
    %1122 = vmatpush1.msra.mxu0 %v1121
    %1123 = vmatprep.subr.mxu0 0.0
    %v1124 = vand.u32 %v765, 4294901760
    %1125 = vmatpush1.msra.mxu0 %v1124
    %1126 = vmatprep.subr.mxu0 0.0
    %v1127 = vand.u32 %v764, 4294901760
    %1128 = vmatpush1.msra.mxu0 %v1127
    %1129 = vmatprep.subr.mxu0 0.0
    %v1130 = vand.u32 %v763, 4294901760
    %1131 = vmatpush1.msra.mxu0 %v1130
    %1132 = vmatprep.subr.mxu0 0.0
    %v1133 = vand.u32 %v762, 4294901760
    %1134 = vmatpush1.msra.mxu0 %v1133
    %1135 = vmatprep.subr.mxu0 0.0
    %v1136 = vand.u32 %v761, 4294901760
    %1137 = vmatpush1.msra.mxu0 %v1136
    %1138 = vmatprep.subr.mxu0 0.0
    %v1139 = vand.u32 %v760, 4294901760
    %1140 = vmatpush1.msra.mxu0 %v1139
    %1141 = vmatprep.subr.mxu0 0.0
    %v1142 = vand.u32 %v759, 4294901760
    %1143 = vmatpush1.msra.mxu0 %v1142
    %1144 = vmatprep.subr.mxu0 0.0
    %v1145 = vand.u32 %v758, 4294901760
    %1146 = vmatpush1.msra.mxu0 %v1145
    %1147 = vmatprep.subr.mxu0 0.0
    %v1148 = vand.u32 %v757, 4294901760
    %1149 = vmatpush1.msra.mxu0 %v1148
    %1150 = vmatprep.subr.mxu0 0.0
    %v1151 = vand.u32 %v756, 4294901760
    %1152 = vmatpush1.msra.mxu0 %v1151
    %1153 = vmatprep.subr.mxu0 0.0
    %v1154 = vand.u32 %v755, 4294901760
    %1155 = vmatpush1.msra.mxu0 %v1154
    %1156 = vmatprep.subr.mxu0 0.0
    %v1157 = vand.u32 %v754, 4294901760
    %1158 = vmatpush1.msra.mxu0 %v1157
    %1159 = vmatprep.subr.mxu0 0.0
    %v1160 = vand.u32 %v753, 4294901760
    %1161 = vmatpush1.msra.mxu0 %v1160
    %1162 = vmatprep.subr.mxu0 0.0
    %v1163 = vand.u32 %v752, 4294901760
    %1164 = vmatpush1.msra.mxu0 %v1163
    %1165 = vmatprep.subr.mxu0 0.0
    %v1166 = vand.u32 %v751, 4294901760
    %1167 = vmatpush1.msra.mxu0 %v1166
    %1168 = vmatprep.subr.mxu0 0.0
    %1169 = vmatpush2.msra.mxu0 0.0
    %1170 = vmatprep.subr.mxu0 0.0
    %1171 = vmatpush2.msra.mxu0 0.0
    %1172 = vmatprep.subr.mxu0 0.0
    %1173 = vmatpush2.msra.mxu0 0.0
    %1174 = vmatprep.subr.mxu0 0.0
    %1175 = vmatpush2.msra.mxu0 0.0
    %1176 = vmatprep.subr.mxu0 0.0
    %1177 = vmatpush2.msra.mxu0 0.0
    %1178 = vmatprep.subr.mxu0 0.0
    %1179 = vmatpush2.msra.mxu0 0.0
    %1180 = vmatprep.subr.mxu0 0.0
    %1181 = vmatpush2.msra.mxu0 0.0
    %1182 = vmatprep.subr.mxu0 0.0
    %1183 = vmatpush2.msra.mxu0 0.0
    %1184 = vmatprep.subr.mxu0 0.0
    %1185 = vmatpush2.msra.mxu0 0.0
    %1186 = vmatprep.subr.mxu0 0.0
    %1187 = vmatpush2.msra.mxu0 0.0
    %1188 = vmatprep.subr.mxu0 0.0
    %1189 = vmatpush2.msra.mxu0 0.0
    %1190 = vmatprep.subr.mxu0 0.0
    %1191 = vmatpush2.msra.mxu0 0.0
    %1192 = vmatprep.subr.mxu0 0.0
    %1193 = vmatpush2.msra.mxu0 0.0
    %1194 = vmatprep.subr.mxu0 0.0
    %1195 = vmatpush2.msra.mxu0 0.0
    %1196 = vmatprep.subr.mxu0 0.0
    %1197 = vmatpush2.msra.mxu0 0.0
    %1198 = vmatprep.subr.mxu0 0.0
    %1199 = vmatpush2.msra.mxu0 0.0
    %1200 = vmatprep.mubr.f32.mxu0 0.0
    %v1201 = vand.u32 %v750, 4294901760
    %v1202 = vsub.f32 %v750, %v1201
    %v1203 = vand.u32 %v1202, 4294901760
    %1204 = vmatmul.mubr.f32.gmra.mxu0 %v1203
    %v1205 = vpop.f32.mrf.mxu0
    %v1206 = vadd.f32 %v1117, %v1205
    %v1207 = vpop.f32.mrf.mxu0
    %1208 = vdwg.mxu0
    %1209 = vmatprep.subr.mxu0 0.0
    %v1210 = vand.u32 %v766, 4294901760
    %v1211 = vsub.f32 %v766, %v1210
    %v1212 = vand.u32 %v1211, 4294901760
    %1213 = vmatpush1.msra.mxu0 %v1212
    %1214 = vmatprep.subr.mxu0 0.0
    %v1215 = vand.u32 %v765, 4294901760
    %v1216 = vsub.f32 %v765, %v1215
    %v1217 = vand.u32 %v1216, 4294901760
    %1218 = vmatpush1.msra.mxu0 %v1217
    %1219 = vmatprep.subr.mxu0 0.0
    %v1220 = vand.u32 %v764, 4294901760
    %v1221 = vsub.f32 %v764, %v1220
    %v1222 = vand.u32 %v1221, 4294901760
    %1223 = vmatpush1.msra.mxu0 %v1222
    %1224 = vmatprep.subr.mxu0 0.0
    %v1225 = vand.u32 %v763, 4294901760
    %v1226 = vsub.f32 %v763, %v1225
    %v1227 = vand.u32 %v1226, 4294901760
    %1228 = vmatpush1.msra.mxu0 %v1227
    %1229 = vmatprep.subr.mxu0 0.0
    %v1230 = vand.u32 %v762, 4294901760
    %v1231 = vsub.f32 %v762, %v1230
    %v1232 = vand.u32 %v1231, 4294901760
    %1233 = vmatpush1.msra.mxu0 %v1232
    %1234 = vmatprep.subr.mxu0 0.0
    %v1235 = vand.u32 %v761, 4294901760
    %v1236 = vsub.f32 %v761, %v1235
    %v1237 = vand.u32 %v1236, 4294901760
    %1238 = vmatpush1.msra.mxu0 %v1237
    %1239 = vmatprep.subr.mxu0 0.0
    %v1240 = vand.u32 %v760, 4294901760
    %v1241 = vsub.f32 %v760, %v1240
    %v1242 = vand.u32 %v1241, 4294901760
    %1243 = vmatpush1.msra.mxu0 %v1242
    %1244 = vmatprep.subr.mxu0 0.0
    %v1245 = vand.u32 %v759, 4294901760
    %v1246 = vsub.f32 %v759, %v1245
    %v1247 = vand.u32 %v1246, 4294901760
    %1248 = vmatpush1.msra.mxu0 %v1247
    %1249 = vmatprep.subr.mxu0 0.0
    %v1250 = vand.u32 %v758, 4294901760
    %v1251 = vsub.f32 %v758, %v1250
    %v1252 = vand.u32 %v1251, 4294901760
    %1253 = vmatpush1.msra.mxu0 %v1252
    %1254 = vmatprep.subr.mxu0 0.0
    %v1255 = vand.u32 %v757, 4294901760
    %v1256 = vsub.f32 %v757, %v1255
    %v1257 = vand.u32 %v1256, 4294901760
    %1258 = vmatpush1.msra.mxu0 %v1257
    %1259 = vmatprep.subr.mxu0 0.0
    %v1260 = vand.u32 %v756, 4294901760
    %v1261 = vsub.f32 %v756, %v1260
    %v1262 = vand.u32 %v1261, 4294901760
    %1263 = vmatpush1.msra.mxu0 %v1262
    %1264 = vmatprep.subr.mxu0 0.0
    %v1265 = vand.u32 %v755, 4294901760
    %v1266 = vsub.f32 %v755, %v1265
    %v1267 = vand.u32 %v1266, 4294901760
    %1268 = vmatpush1.msra.mxu0 %v1267
    %1269 = vmatprep.subr.mxu0 0.0
    %v1270 = vand.u32 %v754, 4294901760
    %v1271 = vsub.f32 %v754, %v1270
    %v1272 = vand.u32 %v1271, 4294901760
    %1273 = vmatpush1.msra.mxu0 %v1272
    %1274 = vmatprep.subr.mxu0 0.0
    %v1275 = vand.u32 %v753, 4294901760
    %v1276 = vsub.f32 %v753, %v1275
    %v1277 = vand.u32 %v1276, 4294901760
    %1278 = vmatpush1.msra.mxu0 %v1277
    %1279 = vmatprep.subr.mxu0 0.0
    %v1280 = vand.u32 %v752, 4294901760
    %v1281 = vsub.f32 %v752, %v1280
    %v1282 = vand.u32 %v1281, 4294901760
    %1283 = vmatpush1.msra.mxu0 %v1282
    %1284 = vmatprep.subr.mxu0 0.0
    %v1285 = vand.u32 %v751, 4294901760
    %v1286 = vsub.f32 %v751, %v1285
    %v1287 = vand.u32 %v1286, 4294901760
    %1288 = vmatpush1.msra.mxu0 %v1287
    %1289 = vmatprep.subr.mxu0 0.0
    %1290 = vmatpush2.msra.mxu0 0.0
    %1291 = vmatprep.subr.mxu0 0.0
    %1292 = vmatpush2.msra.mxu0 0.0
    %1293 = vmatprep.subr.mxu0 0.0
    %1294 = vmatpush2.msra.mxu0 0.0
    %1295 = vmatprep.subr.mxu0 0.0
    %1296 = vmatpush2.msra.mxu0 0.0
    %1297 = vmatprep.subr.mxu0 0.0
    %1298 = vmatpush2.msra.mxu0 0.0
    %1299 = vmatprep.subr.mxu0 0.0
    %1300 = vmatpush2.msra.mxu0 0.0
    %1301 = vmatprep.subr.mxu0 0.0
    %1302 = vmatpush2.msra.mxu0 0.0
    %1303 = vmatprep.subr.mxu0 0.0
    %1304 = vmatpush2.msra.mxu0 0.0
    %1305 = vmatprep.subr.mxu0 0.0
    %1306 = vmatpush2.msra.mxu0 0.0
    %1307 = vmatprep.subr.mxu0 0.0
    %1308 = vmatpush2.msra.mxu0 0.0
    %1309 = vmatprep.subr.mxu0 0.0
    %1310 = vmatpush2.msra.mxu0 0.0
    %1311 = vmatprep.subr.mxu0 0.0
    %1312 = vmatpush2.msra.mxu0 0.0
    %1313 = vmatprep.subr.mxu0 0.0
    %1314 = vmatpush2.msra.mxu0 0.0
    %1315 = vmatprep.subr.mxu0 0.0
    %1316 = vmatpush2.msra.mxu0 0.0
    %1317 = vmatprep.subr.mxu0 0.0
    %1318 = vmatpush2.msra.mxu0 0.0
    %1319 = vmatprep.subr.mxu0 0.0
    %1320 = vmatpush2.msra.mxu0 0.0
    %1321 = vmatprep.mubr.f32.mxu0 0.0
    %v1322 = vand.u32 %v750, 4294901760
    %1323 = vmatmul.mubr.f32.gmra.mxu0 %v1322
    %v1324 = vpop.f32.mrf.mxu0
    %v1325 = vadd.f32 %v1206, %v1324
    %v1326 = vpop.f32.mrf.mxu0
    %1327 = vdwg.mxu0
    %1328 = vmatprep.subr.mxu0 0.0
    %v1329 = vand.u32 %v766, 4294901760
    %1330 = vmatpush1.msra.mxu0 %v1329
    %1331 = vmatprep.subr.mxu0 0.0
    %v1332 = vand.u32 %v765, 4294901760
    %1333 = vmatpush1.msra.mxu0 %v1332
    %1334 = vmatprep.subr.mxu0 0.0
    %v1335 = vand.u32 %v764, 4294901760
    %1336 = vmatpush1.msra.mxu0 %v1335
    %1337 = vmatprep.subr.mxu0 0.0
    %v1338 = vand.u32 %v763, 4294901760
    %1339 = vmatpush1.msra.mxu0 %v1338
    %1340 = vmatprep.subr.mxu0 0.0
    %v1341 = vand.u32 %v762, 4294901760
    %1342 = vmatpush1.msra.mxu0 %v1341
    %1343 = vmatprep.subr.mxu0 0.0
    %v1344 = vand.u32 %v761, 4294901760
    %1345 = vmatpush1.msra.mxu0 %v1344
    %1346 = vmatprep.subr.mxu0 0.0
    %v1347 = vand.u32 %v760, 4294901760
    %1348 = vmatpush1.msra.mxu0 %v1347
    %1349 = vmatprep.subr.mxu0 0.0
    %v1350 = vand.u32 %v759, 4294901760
    %1351 = vmatpush1.msra.mxu0 %v1350
    %1352 = vmatprep.subr.mxu0 0.0
    %v1353 = vand.u32 %v758, 4294901760
    %1354 = vmatpush1.msra.mxu0 %v1353
    %1355 = vmatprep.subr.mxu0 0.0
    %v1356 = vand.u32 %v757, 4294901760
    %1357 = vmatpush1.msra.mxu0 %v1356
    %1358 = vmatprep.subr.mxu0 0.0
    %v1359 = vand.u32 %v756, 4294901760
    %1360 = vmatpush1.msra.mxu0 %v1359
    %1361 = vmatprep.subr.mxu0 0.0
    %v1362 = vand.u32 %v755, 4294901760
    %1363 = vmatpush1.msra.mxu0 %v1362
    %1364 = vmatprep.subr.mxu0 0.0
    %v1365 = vand.u32 %v754, 4294901760
    %1366 = vmatpush1.msra.mxu0 %v1365
    %1367 = vmatprep.subr.mxu0 0.0
    %v1368 = vand.u32 %v753, 4294901760
    %1369 = vmatpush1.msra.mxu0 %v1368
    %1370 = vmatprep.subr.mxu0 0.0
    %v1371 = vand.u32 %v752, 4294901760
    %1372 = vmatpush1.msra.mxu0 %v1371
    %1373 = vmatprep.subr.mxu0 0.0
    %v1374 = vand.u32 %v751, 4294901760
    %1375 = vmatpush1.msra.mxu0 %v1374
    %1376 = vmatprep.subr.mxu0 0.0
    %1377 = vmatpush2.msra.mxu0 0.0
    %1378 = vmatprep.subr.mxu0 0.0
    %1379 = vmatpush2.msra.mxu0 0.0
    %1380 = vmatprep.subr.mxu0 0.0
    %1381 = vmatpush2.msra.mxu0 0.0
    %1382 = vmatprep.subr.mxu0 0.0
    %1383 = vmatpush2.msra.mxu0 0.0
    %1384 = vmatprep.subr.mxu0 0.0
    %1385 = vmatpush2.msra.mxu0 0.0
    %1386 = vmatprep.subr.mxu0 0.0
    %1387 = vmatpush2.msra.mxu0 0.0
    %1388 = vmatprep.subr.mxu0 0.0
    %1389 = vmatpush2.msra.mxu0 0.0
    %1390 = vmatprep.subr.mxu0 0.0
    %1391 = vmatpush2.msra.mxu0 0.0
    %1392 = vmatprep.subr.mxu0 0.0
    %1393 = vmatpush2.msra.mxu0 0.0
    %1394 = vmatprep.subr.mxu0 0.0
    %1395 = vmatpush2.msra.mxu0 0.0
    %1396 = vmatprep.subr.mxu0 0.0
    %1397 = vmatpush2.msra.mxu0 0.0
    %1398 = vmatprep.subr.mxu0 0.0
    %1399 = vmatpush2.msra.mxu0 0.0
    %1400 = vmatprep.subr.mxu0 0.0
    %1401 = vmatpush2.msra.mxu0 0.0
    %1402 = vmatprep.subr.mxu0 0.0
    %1403 = vmatpush2.msra.mxu0 0.0
    %1404 = vmatprep.subr.mxu0 0.0
    %1405 = vmatpush2.msra.mxu0 0.0
    %1406 = vmatprep.subr.mxu0 0.0
    %1407 = vmatpush2.msra.mxu0 0.0
    %1408 = vmatprep.mubr.f32.mxu0 0.0
    %v1409 = vand.u32 %v750, 4294901760
    %1410 = vmatmul.mubr.f32.gmra.mxu0 %v1409
    %v1411 = vpop.f32.mrf.mxu0
    %v1412 = vadd.f32 %v1325, %v1411
    %v1413 = vpop.f32.mrf.mxu0
    %1414 = vdwg.mxu0
    %v1415 = vmax.f32 %v1412, 0.0
    %v1416 = vld [vmem:[#allocation8] sm:$0xff]
    %v1417 = vld [vmem:[#allocation8 + $0x8] sm:$0xff]
    %v1418 = vld [vmem:[#allocation8 + $0x10] sm:$0xff]
    %v1419 = vld [vmem:[#allocation8 + $0x18] sm:$0xff]
    %v1420 = vld [vmem:[#allocation8 + $0x20] sm:$0xff]
    %v1421 = vld [vmem:[#allocation8 + $0x28] sm:$0xff]
    %v1422 = vld [vmem:[#allocation8 + $0x30] sm:$0xff]
    %v1423 = vld [vmem:[#allocation8 + $0x38] sm:$0xff]
    %v1424 = vld [vmem:[#allocation8 + $0x40] sm:$0xff]
    %v1425 = vld [vmem:[#allocation8 + $0x48] sm:$0xff]
    %v1426 = vld [vmem:[#allocation8 + $0x50] sm:$0xff]
    %v1427 = vld [vmem:[#allocation8 + $0x58] sm:$0xff]
    %v1428 = vld [vmem:[#allocation8 + $0x60] sm:$0xff]
    %v1429 = vld [vmem:[#allocation8 + $0x68] sm:$0xff]
    %v1430 = vld [vmem:[#allocation8 + $0x70] sm:$0xff]
    %v1431 = vld [vmem:[#allocation8 + $0x78] sm:$0xff]
    %v1432 = vld [vmem:[%s6] sm:$0x1]
    %v1434 = vlaneseq
    %v1435 = vshrl.u32 %v1434, 7
    %v1436 = vsub.s32 0, %v1435
    %v1437 = vrot.slane %v1432, %v1436
    %1439 = vmatprep.subr.mxu0 0.0
    %v1440 = vand.u32 %v1431, 4294901760
    %1441 = vmatpush1.msra.mxu0 %v1440
    %1442 = vmatprep.subr.mxu0 0.0
    %v1443 = vand.u32 %v1430, 4294901760
    %1444 = vmatpush1.msra.mxu0 %v1443
    %1445 = vmatprep.subr.mxu0 0.0
    %v1446 = vand.u32 %v1429, 4294901760
    %1447 = vmatpush1.msra.mxu0 %v1446
    %1448 = vmatprep.subr.mxu0 0.0
    %v1449 = vand.u32 %v1428, 4294901760
    %1450 = vmatpush1.msra.mxu0 %v1449
    %1451 = vmatprep.subr.mxu0 0.0
    %v1452 = vand.u32 %v1427, 4294901760
    %1453 = vmatpush1.msra.mxu0 %v1452
    %1454 = vmatprep.subr.mxu0 0.0
    %v1455 = vand.u32 %v1426, 4294901760
    %1456 = vmatpush1.msra.mxu0 %v1455
    %1457 = vmatprep.subr.mxu0 0.0
    %v1458 = vand.u32 %v1425, 4294901760
    %1459 = vmatpush1.msra.mxu0 %v1458
    %1460 = vmatprep.subr.mxu0 0.0
    %v1461 = vand.u32 %v1424, 4294901760
    %1462 = vmatpush1.msra.mxu0 %v1461
    %1463 = vmatprep.subr.mxu0 0.0
    %v1464 = vand.u32 %v1423, 4294901760
    %1465 = vmatpush1.msra.mxu0 %v1464
    %1466 = vmatprep.subr.mxu0 0.0
    %v1467 = vand.u32 %v1422, 4294901760
    %1468 = vmatpush1.msra.mxu0 %v1467
    %1469 = vmatprep.subr.mxu0 0.0
    %v1470 = vand.u32 %v1421, 4294901760
    %1471 = vmatpush1.msra.mxu0 %v1470
    %1472 = vmatprep.subr.mxu0 0.0
    %v1473 = vand.u32 %v1420, 4294901760
    %1474 = vmatpush1.msra.mxu0 %v1473
    %1475 = vmatprep.subr.mxu0 0.0
    %v1476 = vand.u32 %v1419, 4294901760
    %1477 = vmatpush1.msra.mxu0 %v1476
    %1478 = vmatprep.subr.mxu0 0.0
    %v1479 = vand.u32 %v1418, 4294901760
    %1480 = vmatpush1.msra.mxu0 %v1479
    %1481 = vmatprep.subr.mxu0 0.0
    %v1482 = vand.u32 %v1417, 4294901760
    %1483 = vmatpush1.msra.mxu0 %v1482
    %1484 = vmatprep.subr.mxu0 0.0
    %v1485 = vand.u32 %v1416, 4294901760
    %1486 = vmatpush1.msra.mxu0 %v1485
    %1487 = vmatprep.subr.mxu0 0.0
    %1488 = vmatpush2.msra.mxu0 0.0
    %1489 = vmatprep.subr.mxu0 0.0
    %1490 = vmatpush2.msra.mxu0 0.0
    %1491 = vmatprep.subr.mxu0 0.0
    %1492 = vmatpush2.msra.mxu0 0.0
    %1493 = vmatprep.subr.mxu0 0.0
    %1494 = vmatpush2.msra.mxu0 0.0
    %1495 = vmatprep.subr.mxu0 0.0
    %1496 = vmatpush2.msra.mxu0 0.0
    %1497 = vmatprep.subr.mxu0 0.0
    %1498 = vmatpush2.msra.mxu0 0.0
    %1499 = vmatprep.subr.mxu0 0.0
    %1500 = vmatpush2.msra.mxu0 0.0
    %1501 = vmatprep.subr.mxu0 0.0
    %1502 = vmatpush2.msra.mxu0 0.0
    %1503 = vmatprep.subr.mxu0 0.0
    %1504 = vmatpush2.msra.mxu0 0.0
    %1505 = vmatprep.subr.mxu0 0.0
    %1506 = vmatpush2.msra.mxu0 0.0
    %1507 = vmatprep.subr.mxu0 0.0
    %1508 = vmatpush2.msra.mxu0 0.0
    %1509 = vmatprep.subr.mxu0 0.0
    %1510 = vmatpush2.msra.mxu0 0.0
    %1511 = vmatprep.subr.mxu0 0.0
    %1512 = vmatpush2.msra.mxu0 0.0
    %1513 = vmatprep.subr.mxu0 0.0
    %1514 = vmatpush2.msra.mxu0 0.0
    %1515 = vmatprep.subr.mxu0 0.0
    %1516 = vmatpush2.msra.mxu0 0.0
    %1517 = vmatprep.subr.mxu0 0.0
    %1518 = vmatpush2.msra.mxu0 0.0
    %1519 = vmatprep.mubr.f32.mxu0 0.0
    %v1520 = vand.u32 %v1415, 4294901760
    %v1521 = vsub.f32 %v1415, %v1520
    %v1522 = vand.u32 %v1521, 4294901760
    %v1523 = vsub.f32 %v1521, %v1522
    %v1524 = vand.u32 %v1523, 4294901760
    %1525 = vmatmul.mubr.f32.gmra.mxu0 %v1524
    %v1526 = vpop.f32.mrf.mxu0
    %v1527 = vadd.f32 %v1437, %v1526
    %v1528 = vpop.f32.mrf.mxu0
    %1529 = vdwg.mxu0
    %1530 = vmatprep.subr.mxu0 0.0
    %v1531 = vand.u32 %v1431, 4294901760
    %v1532 = vsub.f32 %v1431, %v1531
    %v1533 = vand.u32 %v1532, 4294901760
    %v1534 = vsub.f32 %v1532, %v1533
    %v1535 = vand.u32 %v1534, 4294901760
    %1536 = vmatpush1.msra.mxu0 %v1535
    %1537 = vmatprep.subr.mxu0 0.0
    %v1538 = vand.u32 %v1430, 4294901760
    %v1539 = vsub.f32 %v1430, %v1538
    %v1540 = vand.u32 %v1539, 4294901760
    %v1541 = vsub.f32 %v1539, %v1540
    %v1542 = vand.u32 %v1541, 4294901760
    %1543 = vmatpush1.msra.mxu0 %v1542
    %1544 = vmatprep.subr.mxu0 0.0
    %v1545 = vand.u32 %v1429, 4294901760
    %v1546 = vsub.f32 %v1429, %v1545
    %v1547 = vand.u32 %v1546, 4294901760
    %v1548 = vsub.f32 %v1546, %v1547
    %v1549 = vand.u32 %v1548, 4294901760
    %1550 = vmatpush1.msra.mxu0 %v1549
    %1551 = vmatprep.subr.mxu0 0.0
    %v1552 = vand.u32 %v1428, 4294901760
    %v1553 = vsub.f32 %v1428, %v1552
    %v1554 = vand.u32 %v1553, 4294901760
    %v1555 = vsub.f32 %v1553, %v1554
    %v1556 = vand.u32 %v1555, 4294901760
    %1557 = vmatpush1.msra.mxu0 %v1556
    %1558 = vmatprep.subr.mxu0 0.0
    %v1559 = vand.u32 %v1427, 4294901760
    %v1560 = vsub.f32 %v1427, %v1559
    %v1561 = vand.u32 %v1560, 4294901760
    %v1562 = vsub.f32 %v1560, %v1561
    %v1563 = vand.u32 %v1562, 4294901760
    %1564 = vmatpush1.msra.mxu0 %v1563
    %1565 = vmatprep.subr.mxu0 0.0
    %v1566 = vand.u32 %v1426, 4294901760
    %v1567 = vsub.f32 %v1426, %v1566
    %v1568 = vand.u32 %v1567, 4294901760
    %v1569 = vsub.f32 %v1567, %v1568
    %v1570 = vand.u32 %v1569, 4294901760
    %1571 = vmatpush1.msra.mxu0 %v1570
    %1572 = vmatprep.subr.mxu0 0.0
    %v1573 = vand.u32 %v1425, 4294901760
    %v1574 = vsub.f32 %v1425, %v1573
    %v1575 = vand.u32 %v1574, 4294901760
    %v1576 = vsub.f32 %v1574, %v1575
    %v1577 = vand.u32 %v1576, 4294901760
    %1578 = vmatpush1.msra.mxu0 %v1577
    %1579 = vmatprep.subr.mxu0 0.0
    %v1580 = vand.u32 %v1424, 4294901760
    %v1581 = vsub.f32 %v1424, %v1580
    %v1582 = vand.u32 %v1581, 4294901760
    %v1583 = vsub.f32 %v1581, %v1582
    %v1584 = vand.u32 %v1583, 4294901760
    %1585 = vmatpush1.msra.mxu0 %v1584
    %1586 = vmatprep.subr.mxu0 0.0
    %v1587 = vand.u32 %v1423, 4294901760
    %v1588 = vsub.f32 %v1423, %v1587
    %v1589 = vand.u32 %v1588, 4294901760
    %v1590 = vsub.f32 %v1588, %v1589
    %v1591 = vand.u32 %v1590, 4294901760
    %1592 = vmatpush1.msra.mxu0 %v1591
    %1593 = vmatprep.subr.mxu0 0.0
    %v1594 = vand.u32 %v1422, 4294901760
    %v1595 = vsub.f32 %v1422, %v1594
    %v1596 = vand.u32 %v1595, 4294901760
    %v1597 = vsub.f32 %v1595, %v1596
    %v1598 = vand.u32 %v1597, 4294901760
    %1599 = vmatpush1.msra.mxu0 %v1598
    %1600 = vmatprep.subr.mxu0 0.0
    %v1601 = vand.u32 %v1421, 4294901760
    %v1602 = vsub.f32 %v1421, %v1601
    %v1603 = vand.u32 %v1602, 4294901760
    %v1604 = vsub.f32 %v1602, %v1603
    %v1605 = vand.u32 %v1604, 4294901760
    %1606 = vmatpush1.msra.mxu0 %v1605
    %1607 = vmatprep.subr.mxu0 0.0
    %v1608 = vand.u32 %v1420, 4294901760
    %v1609 = vsub.f32 %v1420, %v1608
    %v1610 = vand.u32 %v1609, 4294901760
    %v1611 = vsub.f32 %v1609, %v1610
    %v1612 = vand.u32 %v1611, 4294901760
    %1613 = vmatpush1.msra.mxu0 %v1612
    %1614 = vmatprep.subr.mxu0 0.0
    %v1615 = vand.u32 %v1419, 4294901760
    %v1616 = vsub.f32 %v1419, %v1615
    %v1617 = vand.u32 %v1616, 4294901760
    %v1618 = vsub.f32 %v1616, %v1617
    %v1619 = vand.u32 %v1618, 4294901760
    %1620 = vmatpush1.msra.mxu0 %v1619
    %1621 = vmatprep.subr.mxu0 0.0
    %v1622 = vand.u32 %v1418, 4294901760
    %v1623 = vsub.f32 %v1418, %v1622
    %v1624 = vand.u32 %v1623, 4294901760
    %v1625 = vsub.f32 %v1623, %v1624
    %v1626 = vand.u32 %v1625, 4294901760
    %1627 = vmatpush1.msra.mxu0 %v1626
    %1628 = vmatprep.subr.mxu0 0.0
    %v1629 = vand.u32 %v1417, 4294901760
    %v1630 = vsub.f32 %v1417, %v1629
    %v1631 = vand.u32 %v1630, 4294901760
    %v1632 = vsub.f32 %v1630, %v1631
    %v1633 = vand.u32 %v1632, 4294901760
    %1634 = vmatpush1.msra.mxu0 %v1633
    %1635 = vmatprep.subr.mxu0 0.0
    %v1636 = vand.u32 %v1416, 4294901760
    %v1637 = vsub.f32 %v1416, %v1636
    %v1638 = vand.u32 %v1637, 4294901760
    %v1639 = vsub.f32 %v1637, %v1638
    %v1640 = vand.u32 %v1639, 4294901760
    %1641 = vmatpush1.msra.mxu0 %v1640
    %1642 = vmatprep.subr.mxu0 0.0
    %1643 = vmatpush2.msra.mxu0 0.0
    %1644 = vmatprep.subr.mxu0 0.0
    %1645 = vmatpush2.msra.mxu0 0.0
    %1646 = vmatprep.subr.mxu0 0.0
    %1647 = vmatpush2.msra.mxu0 0.0
    %1648 = vmatprep.subr.mxu0 0.0
    %1649 = vmatpush2.msra.mxu0 0.0
    %1650 = vmatprep.subr.mxu0 0.0
    %1651 = vmatpush2.msra.mxu0 0.0
    %1652 = vmatprep.subr.mxu0 0.0
    %1653 = vmatpush2.msra.mxu0 0.0
    %1654 = vmatprep.subr.mxu0 0.0
    %1655 = vmatpush2.msra.mxu0 0.0
    %1656 = vmatprep.subr.mxu0 0.0
    %1657 = vmatpush2.msra.mxu0 0.0
    %1658 = vmatprep.subr.mxu0 0.0
    %1659 = vmatpush2.msra.mxu0 0.0
    %1660 = vmatprep.subr.mxu0 0.0
    %1661 = vmatpush2.msra.mxu0 0.0
    %1662 = vmatprep.subr.mxu0 0.0
    %1663 = vmatpush2.msra.mxu0 0.0
    %1664 = vmatprep.subr.mxu0 0.0
    %1665 = vmatpush2.msra.mxu0 0.0
    %1666 = vmatprep.subr.mxu0 0.0
    %1667 = vmatpush2.msra.mxu0 0.0
    %1668 = vmatprep.subr.mxu0 0.0
    %1669 = vmatpush2.msra.mxu0 0.0
    %1670 = vmatprep.subr.mxu0 0.0
    %1671 = vmatpush2.msra.mxu0 0.0
    %1672 = vmatprep.subr.mxu0 0.0
    %1673 = vmatpush2.msra.mxu0 0.0
    %1674 = vmatprep.mubr.f32.mxu0 0.0
    %v1675 = vand.u32 %v1415, 4294901760
    %1676 = vmatmul.mubr.f32.gmra.mxu0 %v1675
    %v1677 = vpop.f32.mrf.mxu0
    %v1678 = vadd.f32 %v1527, %v1677
    %v1679 = vpop.f32.mrf.mxu0
    %1680 = vdwg.mxu0
    %1681 = vmatprep.subr.mxu0 0.0
    %v1682 = vand.u32 %v1431, 4294901760
    %v1683 = vsub.f32 %v1431, %v1682
    %1684 = vmatpush1.msra.mxu0 %v1683
    %1685 = vmatprep.subr.mxu0 0.0
    %v1686 = vand.u32 %v1430, 4294901760
    %v1687 = vsub.f32 %v1430, %v1686
    %1688 = vmatpush1.msra.mxu0 %v1687
    %1689 = vmatprep.subr.mxu0 0.0
    %v1690 = vand.u32 %v1429, 4294901760
    %v1691 = vsub.f32 %v1429, %v1690
    %1692 = vmatpush1.msra.mxu0 %v1691
    %1693 = vmatprep.subr.mxu0 0.0
    %v1694 = vand.u32 %v1428, 4294901760
    %v1695 = vsub.f32 %v1428, %v1694
    %1696 = vmatpush1.msra.mxu0 %v1695
    %1697 = vmatprep.subr.mxu0 0.0
    %v1698 = vand.u32 %v1427, 4294901760
    %v1699 = vsub.f32 %v1427, %v1698
    %1700 = vmatpush1.msra.mxu0 %v1699
    %1701 = vmatprep.subr.mxu0 0.0
    %v1702 = vand.u32 %v1426, 4294901760
    %v1703 = vsub.f32 %v1426, %v1702
    %1704 = vmatpush1.msra.mxu0 %v1703
    %1705 = vmatprep.subr.mxu0 0.0
    %v1706 = vand.u32 %v1425, 4294901760
    %v1707 = vsub.f32 %v1425, %v1706
    %1708 = vmatpush1.msra.mxu0 %v1707
    %1709 = vmatprep.subr.mxu0 0.0
    %v1710 = vand.u32 %v1424, 4294901760
    %v1711 = vsub.f32 %v1424, %v1710
    %1712 = vmatpush1.msra.mxu0 %v1711
    %1713 = vmatprep.subr.mxu0 0.0
    %v1714 = vand.u32 %v1423, 4294901760
    %v1715 = vsub.f32 %v1423, %v1714
    %1716 = vmatpush1.msra.mxu0 %v1715
    %1717 = vmatprep.subr.mxu0 0.0
    %v1718 = vand.u32 %v1422, 4294901760
    %v1719 = vsub.f32 %v1422, %v1718
    %1720 = vmatpush1.msra.mxu0 %v1719
    %1721 = vmatprep.subr.mxu0 0.0
    %v1722 = vand.u32 %v1421, 4294901760
    %v1723 = vsub.f32 %v1421, %v1722
    %1724 = vmatpush1.msra.mxu0 %v1723
    %1725 = vmatprep.subr.mxu0 0.0
    %v1726 = vand.u32 %v1420, 4294901760
    %v1727 = vsub.f32 %v1420, %v1726
    %1728 = vmatpush1.msra.mxu0 %v1727
    %1729 = vmatprep.subr.mxu0 0.0
    %v1730 = vand.u32 %v1419, 4294901760
    %v1731 = vsub.f32 %v1419, %v1730
    %1732 = vmatpush1.msra.mxu0 %v1731
    %1733 = vmatprep.subr.mxu0 0.0
    %v1734 = vand.u32 %v1418, 4294901760
    %v1735 = vsub.f32 %v1418, %v1734
    %1736 = vmatpush1.msra.mxu0 %v1735
    %1737 = vmatprep.subr.mxu0 0.0
    %v1738 = vand.u32 %v1417, 4294901760
    %v1739 = vsub.f32 %v1417, %v1738
    %1740 = vmatpush1.msra.mxu0 %v1739
    %1741 = vmatprep.subr.mxu0 0.0
    %v1742 = vand.u32 %v1416, 4294901760
    %v1743 = vsub.f32 %v1416, %v1742
    %1744 = vmatpush1.msra.mxu0 %v1743
    %1745 = vmatprep.subr.mxu0 0.0
    %1746 = vmatpush2.msra.mxu0 0.0
    %1747 = vmatprep.subr.mxu0 0.0
    %1748 = vmatpush2.msra.mxu0 0.0
    %1749 = vmatprep.subr.mxu0 0.0
    %1750 = vmatpush2.msra.mxu0 0.0
    %1751 = vmatprep.subr.mxu0 0.0
    %1752 = vmatpush2.msra.mxu0 0.0
    %1753 = vmatprep.subr.mxu0 0.0
    %1754 = vmatpush2.msra.mxu0 0.0
    %1755 = vmatprep.subr.mxu0 0.0
    %1756 = vmatpush2.msra.mxu0 0.0
    %1757 = vmatprep.subr.mxu0 0.0
    %1758 = vmatpush2.msra.mxu0 0.0
    %1759 = vmatprep.subr.mxu0 0.0
    %1760 = vmatpush2.msra.mxu0 0.0
    %1761 = vmatprep.subr.mxu0 0.0
    %1762 = vmatpush2.msra.mxu0 0.0
    %1763 = vmatprep.subr.mxu0 0.0
    %1764 = vmatpush2.msra.mxu0 0.0
    %1765 = vmatprep.subr.mxu0 0.0
    %1766 = vmatpush2.msra.mxu0 0.0
    %1767 = vmatprep.subr.mxu0 0.0
    %1768 = vmatpush2.msra.mxu0 0.0
    %1769 = vmatprep.subr.mxu0 0.0
    %1770 = vmatpush2.msra.mxu0 0.0
    %1771 = vmatprep.subr.mxu0 0.0
    %1772 = vmatpush2.msra.mxu0 0.0
    %1773 = vmatprep.subr.mxu0 0.0
    %1774 = vmatpush2.msra.mxu0 0.0
    %1775 = vmatprep.subr.mxu0 0.0
    %1776 = vmatpush2.msra.mxu0 0.0
    %1777 = vmatprep.mubr.f32.mxu0 0.0
    %v1778 = vand.u32 %v1415, 4294901760
    %v1779 = vsub.f32 %v1415, %v1778
    %1780 = vmatmul.mubr.f32.gmra.mxu0 %v1779
    %v1781 = vpop.f32.mrf.mxu0
    %v1782 = vadd.f32 %v1678, %v1781
    %v1783 = vpop.f32.mrf.mxu0
    %1784 = vdwg.mxu0
    %1785 = vmatprep.subr.mxu0 0.0
    %v1786 = vand.u32 %v1431, 4294901760
    %1787 = vmatpush1.msra.mxu0 %v1786
    %1788 = vmatprep.subr.mxu0 0.0
    %v1789 = vand.u32 %v1430, 4294901760
    %1790 = vmatpush1.msra.mxu0 %v1789
    %1791 = vmatprep.subr.mxu0 0.0
    %v1792 = vand.u32 %v1429, 4294901760
    %1793 = vmatpush1.msra.mxu0 %v1792
    %1794 = vmatprep.subr.mxu0 0.0
    %v1795 = vand.u32 %v1428, 4294901760
    %1796 = vmatpush1.msra.mxu0 %v1795
    %1797 = vmatprep.subr.mxu0 0.0
    %v1798 = vand.u32 %v1427, 4294901760
    %1799 = vmatpush1.msra.mxu0 %v1798
    %1800 = vmatprep.subr.mxu0 0.0
    %v1801 = vand.u32 %v1426, 4294901760
    %1802 = vmatpush1.msra.mxu0 %v1801
    %1803 = vmatprep.subr.mxu0 0.0
    %v1804 = vand.u32 %v1425, 4294901760
    %1805 = vmatpush1.msra.mxu0 %v1804
    %1806 = vmatprep.subr.mxu0 0.0
    %v1807 = vand.u32 %v1424, 4294901760
    %1808 = vmatpush1.msra.mxu0 %v1807
    %1809 = vmatprep.subr.mxu0 0.0
    %v1810 = vand.u32 %v1423, 4294901760
    %1811 = vmatpush1.msra.mxu0 %v1810
    %1812 = vmatprep.subr.mxu0 0.0
    %v1813 = vand.u32 %v1422, 4294901760
    %1814 = vmatpush1.msra.mxu0 %v1813
    %1815 = vmatprep.subr.mxu0 0.0
    %v1816 = vand.u32 %v1421, 4294901760
    %1817 = vmatpush1.msra.mxu0 %v1816
    %1818 = vmatprep.subr.mxu0 0.0
    %v1819 = vand.u32 %v1420, 4294901760
    %1820 = vmatpush1.msra.mxu0 %v1819
    %1821 = vmatprep.subr.mxu0 0.0
    %v1822 = vand.u32 %v1419, 4294901760
    %1823 = vmatpush1.msra.mxu0 %v1822
    %1824 = vmatprep.subr.mxu0 0.0
    %v1825 = vand.u32 %v1418, 4294901760
    %1826 = vmatpush1.msra.mxu0 %v1825
    %1827 = vmatprep.subr.mxu0 0.0
    %v1828 = vand.u32 %v1417, 4294901760
    %1829 = vmatpush1.msra.mxu0 %v1828
    %1830 = vmatprep.subr.mxu0 0.0
    %v1831 = vand.u32 %v1416, 4294901760
    %1832 = vmatpush1.msra.mxu0 %v1831
    %1833 = vmatprep.subr.mxu0 0.0
    %1834 = vmatpush2.msra.mxu0 0.0
    %1835 = vmatprep.subr.mxu0 0.0
    %1836 = vmatpush2.msra.mxu0 0.0
    %1837 = vmatprep.subr.mxu0 0.0
    %1838 = vmatpush2.msra.mxu0 0.0
    %1839 = vmatprep.subr.mxu0 0.0
    %1840 = vmatpush2.msra.mxu0 0.0
    %1841 = vmatprep.subr.mxu0 0.0
    %1842 = vmatpush2.msra.mxu0 0.0
    %1843 = vmatprep.subr.mxu0 0.0
    %1844 = vmatpush2.msra.mxu0 0.0
    %1845 = vmatprep.subr.mxu0 0.0
    %1846 = vmatpush2.msra.mxu0 0.0
    %1847 = vmatprep.subr.mxu0 0.0
    %1848 = vmatpush2.msra.mxu0 0.0
    %1849 = vmatprep.subr.mxu0 0.0
    %1850 = vmatpush2.msra.mxu0 0.0
    %1851 = vmatprep.subr.mxu0 0.0
    %1852 = vmatpush2.msra.mxu0 0.0
    %1853 = vmatprep.subr.mxu0 0.0
    %1854 = vmatpush2.msra.mxu0 0.0
    %1855 = vmatprep.subr.mxu0 0.0
    %1856 = vmatpush2.msra.mxu0 0.0
    %1857 = vmatprep.subr.mxu0 0.0
    %1858 = vmatpush2.msra.mxu0 0.0
    %1859 = vmatprep.subr.mxu0 0.0
    %1860 = vmatpush2.msra.mxu0 0.0
    %1861 = vmatprep.subr.mxu0 0.0
    %1862 = vmatpush2.msra.mxu0 0.0
    %1863 = vmatprep.subr.mxu0 0.0
    %1864 = vmatpush2.msra.mxu0 0.0
    %1865 = vmatprep.mubr.f32.mxu0 0.0
    %v1866 = vand.u32 %v1415, 4294901760
    %v1867 = vsub.f32 %v1415, %v1866
    %v1868 = vand.u32 %v1867, 4294901760
    %1869 = vmatmul.mubr.f32.gmra.mxu0 %v1868
    %v1870 = vpop.f32.mrf.mxu0
    %v1871 = vadd.f32 %v1782, %v1870
    %v1872 = vpop.f32.mrf.mxu0
    %1873 = vdwg.mxu0
    %1874 = vmatprep.subr.mxu0 0.0
    %v1875 = vand.u32 %v1431, 4294901760
    %v1876 = vsub.f32 %v1431, %v1875
    %v1877 = vand.u32 %v1876, 4294901760
    %1878 = vmatpush1.msra.mxu0 %v1877
    %1879 = vmatprep.subr.mxu0 0.0
    %v1880 = vand.u32 %v1430, 4294901760
    %v1881 = vsub.f32 %v1430, %v1880
    %v1882 = vand.u32 %v1881, 4294901760
    %1883 = vmatpush1.msra.mxu0 %v1882
    %1884 = vmatprep.subr.mxu0 0.0
    %v1885 = vand.u32 %v1429, 4294901760
    %v1886 = vsub.f32 %v1429, %v1885
    %v1887 = vand.u32 %v1886, 4294901760
    %1888 = vmatpush1.msra.mxu0 %v1887
    %1889 = vmatprep.subr.mxu0 0.0
    %v1890 = vand.u32 %v1428, 4294901760
    %v1891 = vsub.f32 %v1428, %v1890
    %v1892 = vand.u32 %v1891, 4294901760
    %1893 = vmatpush1.msra.mxu0 %v1892
    %1894 = vmatprep.subr.mxu0 0.0
    %v1895 = vand.u32 %v1427, 4294901760
    %v1896 = vsub.f32 %v1427, %v1895
    %v1897 = vand.u32 %v1896, 4294901760
    %1898 = vmatpush1.msra.mxu0 %v1897
    %1899 = vmatprep.subr.mxu0 0.0
    %v1900 = vand.u32 %v1426, 4294901760
    %v1901 = vsub.f32 %v1426, %v1900
    %v1902 = vand.u32 %v1901, 4294901760
    %1903 = vmatpush1.msra.mxu0 %v1902
    %1904 = vmatprep.subr.mxu0 0.0
    %v1905 = vand.u32 %v1425, 4294901760
    %v1906 = vsub.f32 %v1425, %v1905
    %v1907 = vand.u32 %v1906, 4294901760
    %1908 = vmatpush1.msra.mxu0 %v1907
    %1909 = vmatprep.subr.mxu0 0.0
    %v1910 = vand.u32 %v1424, 4294901760
    %v1911 = vsub.f32 %v1424, %v1910
    %v1912 = vand.u32 %v1911, 4294901760
    %1913 = vmatpush1.msra.mxu0 %v1912
    %1914 = vmatprep.subr.mxu0 0.0
    %v1915 = vand.u32 %v1423, 4294901760
    %v1916 = vsub.f32 %v1423, %v1915
    %v1917 = vand.u32 %v1916, 4294901760
    %1918 = vmatpush1.msra.mxu0 %v1917
    %1919 = vmatprep.subr.mxu0 0.0
    %v1920 = vand.u32 %v1422, 4294901760
    %v1921 = vsub.f32 %v1422, %v1920
    %v1922 = vand.u32 %v1921, 4294901760
    %1923 = vmatpush1.msra.mxu0 %v1922
    %1924 = vmatprep.subr.mxu0 0.0
    %v1925 = vand.u32 %v1421, 4294901760
    %v1926 = vsub.f32 %v1421, %v1925
    %v1927 = vand.u32 %v1926, 4294901760
    %1928 = vmatpush1.msra.mxu0 %v1927
    %1929 = vmatprep.subr.mxu0 0.0
    %v1930 = vand.u32 %v1420, 4294901760
    %v1931 = vsub.f32 %v1420, %v1930
    %v1932 = vand.u32 %v1931, 4294901760
    %1933 = vmatpush1.msra.mxu0 %v1932
    %1934 = vmatprep.subr.mxu0 0.0
    %v1935 = vand.u32 %v1419, 4294901760
    %v1936 = vsub.f32 %v1419, %v1935
    %v1937 = vand.u32 %v1936, 4294901760
    %1938 = vmatpush1.msra.mxu0 %v1937
    %1939 = vmatprep.subr.mxu0 0.0
    %v1940 = vand.u32 %v1418, 4294901760
    %v1941 = vsub.f32 %v1418, %v1940
    %v1942 = vand.u32 %v1941, 4294901760
    %1943 = vmatpush1.msra.mxu0 %v1942
    %1944 = vmatprep.subr.mxu0 0.0
    %v1945 = vand.u32 %v1417, 4294901760
    %v1946 = vsub.f32 %v1417, %v1945
    %v1947 = vand.u32 %v1946, 4294901760
    %1948 = vmatpush1.msra.mxu0 %v1947
    %1949 = vmatprep.subr.mxu0 0.0
    %v1950 = vand.u32 %v1416, 4294901760
    %v1951 = vsub.f32 %v1416, %v1950
    %v1952 = vand.u32 %v1951, 4294901760
    %1953 = vmatpush1.msra.mxu0 %v1952
    %1954 = vmatprep.subr.mxu0 0.0
    %1955 = vmatpush2.msra.mxu0 0.0
    %1956 = vmatprep.subr.mxu0 0.0
    %1957 = vmatpush2.msra.mxu0 0.0
    %1958 = vmatprep.subr.mxu0 0.0
    %1959 = vmatpush2.msra.mxu0 0.0
    %1960 = vmatprep.subr.mxu0 0.0
    %1961 = vmatpush2.msra.mxu0 0.0
    %1962 = vmatprep.subr.mxu0 0.0
    %1963 = vmatpush2.msra.mxu0 0.0
    %1964 = vmatprep.subr.mxu0 0.0
    %1965 = vmatpush2.msra.mxu0 0.0
    %1966 = vmatprep.subr.mxu0 0.0
    %1967 = vmatpush2.msra.mxu0 0.0
    %1968 = vmatprep.subr.mxu0 0.0
    %1969 = vmatpush2.msra.mxu0 0.0
    %1970 = vmatprep.subr.mxu0 0.0
    %1971 = vmatpush2.msra.mxu0 0.0
    %1972 = vmatprep.subr.mxu0 0.0
    %1973 = vmatpush2.msra.mxu0 0.0
    %1974 = vmatprep.subr.mxu0 0.0
    %1975 = vmatpush2.msra.mxu0 0.0
    %1976 = vmatprep.subr.mxu0 0.0
    %1977 = vmatpush2.msra.mxu0 0.0
    %1978 = vmatprep.subr.mxu0 0.0
    %1979 = vmatpush2.msra.mxu0 0.0
    %1980 = vmatprep.subr.mxu0 0.0
    %1981 = vmatpush2.msra.mxu0 0.0
    %1982 = vmatprep.subr.mxu0 0.0
    %1983 = vmatpush2.msra.mxu0 0.0
    %1984 = vmatprep.subr.mxu0 0.0
    %1985 = vmatpush2.msra.mxu0 0.0
    %1986 = vmatprep.mubr.f32.mxu0 0.0
    %v1987 = vand.u32 %v1415, 4294901760
    %1988 = vmatmul.mubr.f32.gmra.mxu0 %v1987
    %v1989 = vpop.f32.mrf.mxu0
    %v1990 = vadd.f32 %v1871, %v1989
    %v1991 = vpop.f32.mrf.mxu0
    %1992 = vdwg.mxu0
    %1993 = vmatprep.subr.mxu0 0.0
    %v1994 = vand.u32 %v1431, 4294901760
    %1995 = vmatpush1.msra.mxu0 %v1994
    %1996 = vmatprep.subr.mxu0 0.0
    %v1997 = vand.u32 %v1430, 4294901760
    %1998 = vmatpush1.msra.mxu0 %v1997
    %1999 = vmatprep.subr.mxu0 0.0
    %v2000 = vand.u32 %v1429, 4294901760
    %2001 = vmatpush1.msra.mxu0 %v2000
    %2002 = vmatprep.subr.mxu0 0.0
    %v2003 = vand.u32 %v1428, 4294901760
    %2004 = vmatpush1.msra.mxu0 %v2003
    %2005 = vmatprep.subr.mxu0 0.0
    %v2006 = vand.u32 %v1427, 4294901760
    %2007 = vmatpush1.msra.mxu0 %v2006
    %2008 = vmatprep.subr.mxu0 0.0
    %v2009 = vand.u32 %v1426, 4294901760
    %2010 = vmatpush1.msra.mxu0 %v2009
    %2011 = vmatprep.subr.mxu0 0.0
    %v2012 = vand.u32 %v1425, 4294901760
    %2013 = vmatpush1.msra.mxu0 %v2012
    %2014 = vmatprep.subr.mxu0 0.0
    %v2015 = vand.u32 %v1424, 4294901760
    %2016 = vmatpush1.msra.mxu0 %v2015
    %2017 = vmatprep.subr.mxu0 0.0
    %v2018 = vand.u32 %v1423, 4294901760
    %2019 = vmatpush1.msra.mxu0 %v2018
    %2020 = vmatprep.subr.mxu0 0.0
    %v2021 = vand.u32 %v1422, 4294901760
    %2022 = vmatpush1.msra.mxu0 %v2021
    %2023 = vmatprep.subr.mxu0 0.0
    %v2024 = vand.u32 %v1421, 4294901760
    %2025 = vmatpush1.msra.mxu0 %v2024
    %2026 = vmatprep.subr.mxu0 0.0
    %v2027 = vand.u32 %v1420, 4294901760
    %2028 = vmatpush1.msra.mxu0 %v2027
    %2029 = vmatprep.subr.mxu0 0.0
    %v2030 = vand.u32 %v1419, 4294901760
    %2031 = vmatpush1.msra.mxu0 %v2030
    %2032 = vmatprep.subr.mxu0 0.0
    %v2033 = vand.u32 %v1418, 4294901760
    %2034 = vmatpush1.msra.mxu0 %v2033
    %2035 = vmatprep.subr.mxu0 0.0
    %v2036 = vand.u32 %v1417, 4294901760
    %2037 = vmatpush1.msra.mxu0 %v2036
    %2038 = vmatprep.subr.mxu0 0.0
    %v2039 = vand.u32 %v1416, 4294901760
    %2040 = vmatpush1.msra.mxu0 %v2039
    %2041 = vmatprep.subr.mxu0 0.0
    %2042 = vmatpush2.msra.mxu0 0.0
    %2043 = vmatprep.subr.mxu0 0.0
    %2044 = vmatpush2.msra.mxu0 0.0
    %2045 = vmatprep.subr.mxu0 0.0
    %2046 = vmatpush2.msra.mxu0 0.0
    %2047 = vmatprep.subr.mxu0 0.0
    %2048 = vmatpush2.msra.mxu0 0.0
    %2049 = vmatprep.subr.mxu0 0.0
    %2050 = vmatpush2.msra.mxu0 0.0
    %2051 = vmatprep.subr.mxu0 0.0
    %2052 = vmatpush2.msra.mxu0 0.0
    %2053 = vmatprep.subr.mxu0 0.0
    %2054 = vmatpush2.msra.mxu0 0.0
    %2055 = vmatprep.subr.mxu0 0.0
    %2056 = vmatpush2.msra.mxu0 0.0
    %2057 = vmatprep.subr.mxu0 0.0
    %2058 = vmatpush2.msra.mxu0 0.0
    %2059 = vmatprep.subr.mxu0 0.0
    %2060 = vmatpush2.msra.mxu0 0.0
    %2061 = vmatprep.subr.mxu0 0.0
    %2062 = vmatpush2.msra.mxu0 0.0
    %2063 = vmatprep.subr.mxu0 0.0
    %2064 = vmatpush2.msra.mxu0 0.0
    %2065 = vmatprep.subr.mxu0 0.0
    %2066 = vmatpush2.msra.mxu0 0.0
    %2067 = vmatprep.subr.mxu0 0.0
    %2068 = vmatpush2.msra.mxu0 0.0
    %2069 = vmatprep.subr.mxu0 0.0
    %2070 = vmatpush2.msra.mxu0 0.0
    %2071 = vmatprep.subr.mxu0 0.0
    %2072 = vmatpush2.msra.mxu0 0.0
    %2073 = vmatprep.mubr.f32.mxu0 0.0
    %v2074 = vand.u32 %v1415, 4294901760
    %2075 = vmatmul.mubr.f32.gmra.mxu0 %v2074
    %v2076 = vpop.f32.mrf.mxu0
    %v2077 = vadd.f32 %v1990, %v2076
    %v2078 = vpop.f32.mrf.mxu0
    %2079 = vdwg.mxu0
    %2080 = vst [vmem:[#allocation10] sm:$0xff] %v2077
    // Predicated region
    $region46: #{tpu_custom_call.1} parent=1 // pred_check
      _
    $region47: #{tpu_custom_call.1} parent=1 // pred_check_branch
      %2082 = sbr.rel (0) target = $region49
    $region48: #{tpu_custom_call.1} parent=1 // pred_region
      %s2084 = ssub.s32 128, 128
      %2085 = vsyncadd [#allocation4], %s2084
      %s2087 = sshll.u32 [#allocation10], 4
      %s2088 = int_to_ptr.vmem [resolvable:$true] %s2087
      %2090 = dma.vmem_to_hbm [thread:$0]  %s2088, 128, %s7, [#allocation4]
    $region49: #{tpu_custom_call.1} parent=1 // pred_fallthru
      _
    // Predicated region
    $region50: #{tpu_custom_call.1} parent=1 // pred_check
      _
    $region51: #{tpu_custom_call.1} parent=1 // pred_check_branch
      %2092 = sbr.rel (0) target = $region53
    $region52: #{tpu_custom_call.1} parent=1 // pred_region
      %2093 = dma.done [#allocation4], 128
    $region53: #{tpu_custom_call.1} parent=1 // pred_fallthru
      _
    %2094 = vsyncpa [#allocation3], 1
    %2095 = vsyncpa [#allocation6], 1
    %2096 = vsyncpa [#allocation9], 1
    %2097 = vsyncpa [#allocation4], 1

</llo_original>
